<compile_context>
chip_gen: v5e
topology: v5e:2x2
jax: 0.10.0
libtpu: 0.0.40
codegen_flags: <defaults>
</compile_context>

<pallas_src>
import jax
import jax.numpy as jnp
from jax import lax
from jax.experimental import pallas as pl
from jax.experimental.pallas import tpu as pltpu

K = 5                      # kernel size
DIL = 2                    # dilation
PAD = (K - 1) * DIL // 2   # 'same' padding with dilation=2 -> 4 each side
BN_EPS = 1e-5


def fd_fused_kernel(patch_ref, w_ref, gamma_ref, beta_ref, out_ref):
    """conv(matmul) + BatchNorm(train-mode batch stats) + Mish, fully fused.

    patch_ref: (R, KD)    bf16  im2col patches, R = N*H*W, KD = pad128(K*K*Cin)
    w_ref:     (KD, Cout) bf16  folded + zero-padded conv weights
    gamma_ref: (1, Cout)  f32
    beta_ref:  (1, Cout)  f32
    out_ref:   (R, Cout)  f32
    """
    # Single deep MXU matmul, f32 accumulation.
    conv = jnp.dot(patch_ref[...], w_ref[...],
                   preferred_element_type=jnp.float32)       # (R, Cout) f32

    # BatchNorm batch statistics (biased variance, training mode),
    # two-pass (subtract mean first) to avoid E[x^2]-E[x]^2 cancellation.
    r = conv.shape[0]
    inv_r = 1.0 / r
    mean = jnp.sum(conv, axis=0, keepdims=True) * inv_r       # (1, Cout)
    centered = conv - mean
    var = jnp.sum(centered * centered, axis=0, keepdims=True) * inv_r
    scale = gamma_ref[...] * lax.rsqrt(var + BN_EPS)          # (1, Cout)
    y = centered * scale + beta_ref[...]                      # (R, Cout)

    # Mish with one transcendental:
    #   tanh(softplus(y)) = (u^2 + 2u) / (u^2 + 2u + 2),  u = exp(y)
    # PyTorch softplus threshold: softplus(y) = y for y > 20 => mish(y) = y.
    u = jnp.exp(jnp.minimum(y, 20.0))
    n = u * u + 2.0 * u
    t = n * pl.reciprocal(n + 2.0, approx=True)
    out_ref[...] = jnp.where(y > 20.0, y, y * t)


def fd_forward(x_nchw, weight_oihw, gamma, beta):
    """FD forward. x_nchw: (N, Cin, H, W); weight_oihw: (Cout, Cin, 5, 5)."""
    N, Cin, H, W = x_nchw.shape
    Cout = weight_oihw.shape[0]
    R = N * H * W
    KKC = K * K * Cin
    KD = ((KKC + 127) // 128) * 128          # contraction dim padded to 128

    # --- wrapper-side im2col (XLA strided slices), bf16 for the MXU ---
    x = jnp.transpose(x_nchw, (0, 2, 3, 1)).astype(jnp.bfloat16)   # NHWC
    xp = jnp.pad(x, ((0, 0), (PAD, PAD), (PAD, PAD), (0, 0)))
    taps = [xp[:, ky * DIL:ky * DIL + H, kx * DIL:kx * DIL + W, :]
            for ky in range(K) for kx in range(K)]
    patch = jnp.concatenate(taps, axis=-1)                # (N, H, W, K*K*Cin)
    patch = patch.reshape(R, KKC)
    patch = jnp.pad(patch, ((0, 0), (0, KD - KKC)))       # (R, KD) bf16

    # --- fold + pad weights: OIHW -> (ky, kx, Cin, Cout) -> (KD, Cout) ---
    w = jnp.transpose(weight_oihw.astype(jnp.float32), (2, 3, 1, 0))
    w = w.reshape(KKC, Cout)
    w = jnp.pad(w, ((0, KD - KKC), (0, 0))).astype(jnp.bfloat16)

    gamma2 = gamma.astype(jnp.float32).reshape(1, Cout)
    beta2 = beta.astype(jnp.float32).reshape(1, Cout)

    # --- single fused kernel: whole batch in one grid step ---
    out = pl.pallas_call(
        fd_fused_kernel,
        grid=(1,),
        in_specs=[
            pl.BlockSpec((R, KD), lambda i: (0, 0)),
            pl.BlockSpec((KD, Cout), lambda i: (0, 0)),
            pl.BlockSpec((1, Cout), lambda i: (0, 0)),
            pl.BlockSpec((1, Cout), lambda i: (0, 0)),
        ],
        out_specs=pl.BlockSpec((R, Cout), lambda i: (0, 0)),
        out_shape=jax.ShapeDtypeStruct((R, Cout), jnp.float32),
        compiler_params=pltpu.CompilerParams(
            dimension_semantics=("arbitrary",)),
    )(patch, w, gamma2, beta2)

    # (N*H*W, Cout) -> NCHW at the wrapper boundary (PyTorch interface).
    out = out.reshape(N, H, W, Cout)
    return jnp.transpose(out, (0, 3, 1, 2))


def fd_reference(x_nchw, weight_oihw, gamma, beta):
    """Pure-JAX f32 reference matching PyTorch semantics."""
    out = lax.conv_general_dilated(
        x_nchw.astype(jnp.float32), weight_oihw.astype(jnp.float32),
        window_strides=(1, 1), padding=[(PAD, PAD), (PAD, PAD)],
        rhs_dilation=(DIL, DIL),
        dimension_numbers=("NCHW", "OIHW", "NCHW"))
    mean = out.mean(axis=(0, 2, 3), keepdims=True)
    var = ((out - mean) ** 2).mean(axis=(0, 2, 3), keepdims=True)
    y = (out - mean) / jnp.sqrt(var + BN_EPS)
    y = y * gamma.reshape(1, -1, 1, 1) + beta.reshape(1, -1, 1, 1)
    sp = jnp.where(y > 20.0, y, jnp.log1p(jnp.exp(jnp.minimum(y, 20.0))))
    return y * jnp.tanh(sp)


if __name__ == "__main__":
    key = jax.random.PRNGKey(0)
    k_x, k_w = jax.random.split(key)

    N, Cin, Cout, H, W = 2, 4, 8, 16, 16

    x = jax.random.normal(k_x, (N, Cin, H, W), dtype=jnp.float32)
    weight = jax.random.normal(k_w, (Cout, Cin, K, K), dtype=jnp.float32) * 0.1
    gamma = jnp.ones((Cout,), jnp.float32)   # PyTorch BN default init
    beta = jnp.zeros((Cout,), jnp.float32)

    fd = jax.jit(fd_forward)
    out = jax.block_until_ready(fd(x, weight, gamma, beta))
    ref = jax.block_until_ready(fd_reference(x, weight, gamma, beta))

    assert out.shape == (N, Cout, H, W), out.shape
    # bf16 MXU operands + approx reciprocal in Mish => modestly loosened
    # tolerance vs. the full-f32 PyTorch-semantics reference.
    assert jnp.allclose(out, ref, atol=5e-2, rtol=5e-2), float(
        jnp.max(jnp.abs(out - ref)))

    print("KERNEL_OK")
</pallas_src>

<mosaic_0001>
module attributes {stable_mosaic.version = 11 : i64} {
  func.func @fd_fused_kernel(%arg0: i32, %arg1: memref<512x128xbf16, #tpu.memory_space<vmem>>, %arg2: memref<128x8xbf16, #tpu.memory_space<vmem>>, %arg3: memref<1x8xf32, #tpu.memory_space<vmem>>, %arg4: memref<1x8xf32, #tpu.memory_space<vmem>>, %arg5: memref<512x8xf32, #tpu.memory_space<vmem>>) attributes {dimension_semantics = [#tpu.dimension_semantics<arbitrary>], iteration_bounds = array<i64: 1>, scalar_prefetch = 0 : i64, scratch_operands = 0 : i64, tpu.core_type = #tpu.core_type<tc>, window_params = [{pipeline_mode = #tpu.pipeline_mode<synchronous>, transform_indices = @transform_0, window_bounds = array<i64: 512, 128>}, {pipeline_mode = #tpu.pipeline_mode<synchronous>, transform_indices = @transform_1, window_bounds = array<i64: 128, 8>}, {pipeline_mode = #tpu.pipeline_mode<synchronous>, transform_indices = @transform_2, window_bounds = array<i64: 1, 8>}, {pipeline_mode = #tpu.pipeline_mode<synchronous>, transform_indices = @transform_3, window_bounds = array<i64: 1, 8>}, {pipeline_mode = #tpu.pipeline_mode<synchronous>, transform_indices = @transform_4, window_bounds = array<i64: 512, 8>}]} {
    %c0 = arith.constant 0 : index
    %c0_0 = arith.constant 0 : index
    %0 = vector.load %arg1[%c0, %c0_0] : memref<512x128xbf16, #tpu.memory_space<vmem>>, vector<512x128xbf16>
    %c0_1 = arith.constant 0 : index
    %c0_2 = arith.constant 0 : index
    %1 = vector.load %arg2[%c0_1, %c0_2] : memref<128x8xbf16, #tpu.memory_space<vmem>>, vector<128x8xbf16>
    %cst = arith.constant dense<0.000000e+00> : vector<512x8xf32>
    %2 = tpu.matmul %0, %1, %cst {dimension_numbers = #tpu.dot_dimension_numbers<[1], [0], [0], [1], [0, 0, 1, 1], [], []>} : vector<512x128xbf16>, vector<128x8xbf16>, vector<512x8xf32> -> vector<512x8xf32>
    %cst_3 = arith.constant dense<0.000000e+00> : vector<8xf32>
    %3 = vector.multi_reduction <add>, %2, %cst_3 [0] : vector<512x8xf32> to vector<8xf32>
    %4 = vector.shape_cast %3 : vector<8xf32> to vector<1x8xf32>
    %cst_4 = arith.constant 0.001953125 : f32
    %5 = vector.broadcast %cst_4 : f32 to vector<1x8xf32>
    %6 = arith.mulf %4, %5 : vector<1x8xf32>
    %7 = vector.broadcast %6 : vector<1x8xf32> to vector<512x8xf32>
    %8 = arith.subf %2, %7 : vector<512x8xf32>
    %9 = arith.mulf %8, %8 : vector<512x8xf32>
    %cst_5 = arith.constant dense<0.000000e+00> : vector<8xf32>
    %10 = vector.multi_reduction <add>, %9, %cst_5 [0] : vector<512x8xf32> to vector<8xf32>
    %11 = vector.shape_cast %10 : vector<8xf32> to vector<1x8xf32>
    %cst_6 = arith.constant 0.001953125 : f32
    %12 = vector.broadcast %cst_6 : f32 to vector<1x8xf32>
    %13 = arith.mulf %11, %12 : vector<1x8xf32>
    %c0_7 = arith.constant 0 : index
    %c0_8 = arith.constant 0 : index
    %14 = vector.load %arg3[%c0_7, %c0_8] : memref<1x8xf32, #tpu.memory_space<vmem>>, vector<1x8xf32>
    %cst_9 = arith.constant 9.99999974E-6 : f32
    %15 = vector.broadcast %cst_9 : f32 to vector<1x8xf32>
    %16 = arith.addf %13, %15 : vector<1x8xf32>
    %17 = math.rsqrt %16 : vector<1x8xf32>
    %18 = arith.mulf %14, %17 : vector<1x8xf32>
    %19 = vector.broadcast %18 : vector<1x8xf32> to vector<512x8xf32>
    %20 = arith.mulf %8, %19 : vector<512x8xf32>
    %c0_10 = arith.constant 0 : index
    %c0_11 = arith.constant 0 : index
    %21 = vector.load %arg4[%c0_10, %c0_11] : memref<1x8xf32, #tpu.memory_space<vmem>>, vector<1x8xf32>
    %22 = vector.broadcast %21 : vector<1x8xf32> to vector<512x8xf32>
    %23 = arith.addf %20, %22 : vector<512x8xf32>
    %cst_12 = arith.constant 2.000000e+01 : f32
    %24 = vector.broadcast %cst_12 : f32 to vector<512x8xf32>
    %25 = arith.minimumf %23, %24 : vector<512x8xf32>
    %26 = math.exp %25 : vector<512x8xf32>
    %27 = arith.mulf %26, %26 : vector<512x8xf32>
    %cst_13 = arith.constant 2.000000e+00 : f32
    %28 = vector.broadcast %cst_13 : f32 to vector<512x8xf32>
    %29 = arith.mulf %28, %26 : vector<512x8xf32>
    %30 = arith.addf %27, %29 : vector<512x8xf32>
    %cst_14 = arith.constant 2.000000e+00 : f32
    %31 = vector.broadcast %cst_14 : f32 to vector<512x8xf32>
    %32 = arith.addf %30, %31 : vector<512x8xf32>
    %33 = tpu.reciprocal %32 {approx = true} : vector<512x8xf32> -> vector<512x8xf32>
    %34 = arith.mulf %30, %33 : vector<512x8xf32>
    %cst_15 = arith.constant 2.000000e+01 : f32
    %35 = vector.broadcast %cst_15 : f32 to vector<512x8xf32>
    %36 = arith.cmpf ogt, %23, %35 : vector<512x8xf32>
    %37 = arith.mulf %23, %34 : vector<512x8xf32>
    %38 = arith.select %36, %23, %37 : vector<512x8xi1>, vector<512x8xf32>
    %c0_16 = arith.constant 0 : index
    %c0_17 = arith.constant 0 : index
    %39 = vector.load %arg5[%c0_16, %c0_17] : memref<512x8xf32, #tpu.memory_space<vmem>>, vector<512x8xf32>
    tpu.vector_store %arg5[%c0_16, %c0_17], %38 {strides = array<i32>} : memref<512x8xf32, #tpu.memory_space<vmem>>, vector<512x8xf32>,
    return
  }
  func.func @transform_0(%arg0: i32) -> (i32, i32) {
    %c0_i32 = arith.constant 0 : i32
    %c0_i32_0 = arith.constant 0 : i32
    %c0_i32_1 = arith.constant 0 : i32
    return %c0_i32, %c0_i32_0 : i32, i32
  }
  func.func @transform_1(%arg0: i32) -> (i32, i32) {
    %c0_i32 = arith.constant 0 : i32
    %c0_i32_0 = arith.constant 0 : i32
    %c0_i32_1 = arith.constant 0 : i32
    return %c0_i32, %c0_i32_0 : i32, i32
  }
  func.func @transform_2(%arg0: i32) -> (i32, i32) {
    %c0_i32 = arith.constant 0 : i32
    %c0_i32_0 = arith.constant 0 : i32
    %c0_i32_1 = arith.constant 0 : i32
    return %c0_i32, %c0_i32_0 : i32, i32
  }
  func.func @transform_3(%arg0: i32) -> (i32, i32) {
    %c0_i32 = arith.constant 0 : i32
    %c0_i32_0 = arith.constant 0 : i32
    %c0_i32_1 = arith.constant 0 : i32
    return %c0_i32, %c0_i32_0 : i32, i32
  }
  func.func @transform_4(%arg0: i32) -> (i32, i32) {
    %c0_i32 = arith.constant 0 : i32
    %c0_i32_0 = arith.constant 0 : i32
    %c0_i32_1 = arith.constant 0 : i32
    return %c0_i32, %c0_i32_0 : i32, i32
  }
}

</mosaic_0001>

<llo_original>
// kernel: fd_forward.1
$region0: #{fd_forward.1}
  #allocation0 [shape = 'u32[]', space=smem, size = 0x4, offset = 0x4, fixed_abs, tag = 'smem constant byte address 0x4 - core index']
  #allocation1 [shape = 'u32[72,128]{1,0:T(1,128)}', space=vmem, size = 0x9000, scoped, tag = 'internal scratch']
  %s0 = inlined_call_operand.vmem [shape: bf16[512,128], index: 0, kind: input, shape index: {}]
  %s1 = inlined_call_operand.vmem [shape: bf16[128,8], index: 1, kind: input, shape index: {}]
  %s2 = inlined_call_operand.vmem [shape: f32[1,8], index: 2, kind: input, shape index: {}]
  %s3 = inlined_call_operand.vmem [shape: f32[1,8], index: 3, kind: input, shape index: {}]
  %s4 = inlined_call_operand.vmem [shape: f32[512,8], index: 4, kind: output, shape index: {}]
  %s5 = sld [smem:[#allocation0]]
  $region26: #{fd_forward.1} parent=0
    _
  %s7 = ssub.s32 1, %s5
  %s8 = scalar_select 0, %s7, %s5
  // Predicated region
  $region2: #{fd_forward.1} parent=0 // pred_check
    _
  $region3: #{fd_forward.1} parent=0 // pred_check_branch
    %10 = sbr.rel (0) target = $region5
  $region4: #{fd_forward.1} parent=0 // pred_region
    _
  $region5: #{fd_forward.1} parent=0 // pred_fallthru
    _
  // Predicated region
  $region6: #{fd_forward.1} parent=0 // pred_check
    _
  $region7: #{fd_forward.1} parent=0 // pred_check_branch
    %12 = sbr.rel (0) target = $region9
  $region8: #{fd_forward.1} parent=0 // pred_region
    _
  $region9: #{fd_forward.1} parent=0 // pred_fallthru
    _
  // Predicated region
  $region10: #{fd_forward.1} parent=0 // pred_check
    _
  $region11: #{fd_forward.1} parent=0 // pred_check_branch
    %14 = sbr.rel (0) target = $region13
  $region12: #{fd_forward.1} parent=0 // pred_region
    _
  $region13: #{fd_forward.1} parent=0 // pred_fallthru
    _
  // Predicated region
  $region14: #{fd_forward.1} parent=0 // pred_check
    _
  $region15: #{fd_forward.1} parent=0 // pred_check_branch
    %16 = sbr.rel (0) target = $region17
  $region16: #{fd_forward.1} parent=0 // pred_region
    _
  $region17: #{fd_forward.1} parent=0 // pred_fallthru
    _
  %v17 = vld [vmem:[%s0] sm:$0xf]
  %v18 = vld [vmem:[%s0 + $0x4] sm:$0xf]
  %v19 = vld [vmem:[%s0 + $0x8] sm:$0xf]
  %v20 = vld [vmem:[%s0 + $0xc] sm:$0xf]
  %v21 = vld [vmem:[%s0 + $0x10] sm:$0xf]
  %v22 = vld [vmem:[%s0 + $0x14] sm:$0xf]
  %v23 = vld [vmem:[%s0 + $0x18] sm:$0xf]
  %v24 = vld [vmem:[%s0 + $0x1c] sm:$0xf]
  %v25 = vld [vmem:[%s0 + $0x20] sm:$0xf]
  %v26 = vld [vmem:[%s0 + $0x24] sm:$0xf]
  %v27 = vld [vmem:[%s0 + $0x28] sm:$0xf]
  %v28 = vld [vmem:[%s0 + $0x2c] sm:$0xf]
  %v29 = vld [vmem:[%s0 + $0x30] sm:$0xf]
  %v30 = vld [vmem:[%s0 + $0x34] sm:$0xf]
  %v31 = vld [vmem:[%s0 + $0x38] sm:$0xf]
  %v32 = vld [vmem:[%s0 + $0x3c] sm:$0xf]
  %v33 = vld [vmem:[%s0 + $0x40] sm:$0xf]
  %v34 = vld [vmem:[%s0 + $0x44] sm:$0xf]
  %v35 = vld [vmem:[%s0 + $0x48] sm:$0xf]
  %v36 = vld [vmem:[%s0 + $0x4c] sm:$0xf]
  %v37 = vld [vmem:[%s0 + $0x50] sm:$0xf]
  %v38 = vld [vmem:[%s0 + $0x54] sm:$0xf]
  %v39 = vld [vmem:[%s0 + $0x58] sm:$0xf]
  %v40 = vld [vmem:[%s0 + $0x5c] sm:$0xf]
  %v41 = vld [vmem:[%s0 + $0x60] sm:$0xf]
  %v42 = vld [vmem:[%s0 + $0x64] sm:$0xf]
  %v43 = vld [vmem:[%s0 + $0x68] sm:$0xf]
  %v44 = vld [vmem:[%s0 + $0x6c] sm:$0xf]
  %v45 = vld [vmem:[%s0 + $0x70] sm:$0xf]
  %v46 = vld [vmem:[%s0 + $0x74] sm:$0xf]
  %v47 = vld [vmem:[%s0 + $0x78] sm:$0xf]
  %v48 = vld [vmem:[%s0 + $0x7c] sm:$0xf]
  %v49 = vld [vmem:[%s0 + $0x80] sm:$0xf]
  %v50 = vld [vmem:[%s0 + $0x84] sm:$0xf]
  %v51 = vld [vmem:[%s0 + $0x88] sm:$0xf]
  %v52 = vld [vmem:[%s0 + $0x8c] sm:$0xf]
  %v53 = vld [vmem:[%s0 + $0x90] sm:$0xf]
  %v54 = vld [vmem:[%s0 + $0x94] sm:$0xf]
  %v55 = vld [vmem:[%s0 + $0x98] sm:$0xf]
  %v56 = vld [vmem:[%s0 + $0x9c] sm:$0xf]
  %v57 = vld [vmem:[%s0 + $0xa0] sm:$0xf]
  %v58 = vld [vmem:[%s0 + $0xa4] sm:$0xf]
  %v59 = vld [vmem:[%s0 + $0xa8] sm:$0xf]
  %v60 = vld [vmem:[%s0 + $0xac] sm:$0xf]
  %v61 = vld [vmem:[%s0 + $0xb0] sm:$0xf]
  %v62 = vld [vmem:[%s0 + $0xb4] sm:$0xf]
  %v63 = vld [vmem:[%s0 + $0xb8] sm:$0xf]
  %v64 = vld [vmem:[%s0 + $0xbc] sm:$0xf]
  %v65 = vld [vmem:[%s0 + $0xc0] sm:$0xf]
  %v66 = vld [vmem:[%s0 + $0xc4] sm:$0xf]
  %v67 = vld [vmem:[%s0 + $0xc8] sm:$0xf]
  %v68 = vld [vmem:[%s0 + $0xcc] sm:$0xf]
  %v69 = vld [vmem:[%s0 + $0xd0] sm:$0xf]
  %v70 = vld [vmem:[%s0 + $0xd4] sm:$0xf]
  %v71 = vld [vmem:[%s0 + $0xd8] sm:$0xf]
  %v72 = vld [vmem:[%s0 + $0xdc] sm:$0xf]
  %v73 = vld [vmem:[%s0 + $0xe0] sm:$0xf]
  %v74 = vld [vmem:[%s0 + $0xe4] sm:$0xf]
  %v75 = vld [vmem:[%s0 + $0xe8] sm:$0xf]
  %v76 = vld [vmem:[%s0 + $0xec] sm:$0xf]
  %v77 = vld [vmem:[%s0 + $0xf0] sm:$0xf]
  %v78 = vld [vmem:[%s0 + $0xf4] sm:$0xf]
  %v79 = vld [vmem:[%s0 + $0xf8] sm:$0xf]
  %v80 = vld [vmem:[%s0 + $0xfc] sm:$0xf]
  %v81 = vld [vmem:[%s1] sm:$0xf]
  %v82 = vld [vmem:[%s1 + $0x4] sm:$0xf]
  %v83 = vld [vmem:[%s1 + $0x8] sm:$0xf]
  %v84 = vld [vmem:[%s1 + $0xc] sm:$0xf]
  %v85 = vld [vmem:[%s1 + $0x10] sm:$0xf]
  %v86 = vld [vmem:[%s1 + $0x14] sm:$0xf]
  %v87 = vld [vmem:[%s1 + $0x18] sm:$0xf]
  %v88 = vld [vmem:[%s1 + $0x1c] sm:$0xf]
  %v89 = vld [vmem:[%s1 + $0x20] sm:$0xf]
  %v90 = vld [vmem:[%s1 + $0x24] sm:$0xf]
  %v91 = vld [vmem:[%s1 + $0x28] sm:$0xf]
  %v92 = vld [vmem:[%s1 + $0x2c] sm:$0xf]
  %v93 = vld [vmem:[%s1 + $0x30] sm:$0xf]
  %v94 = vld [vmem:[%s1 + $0x34] sm:$0xf]
  %v95 = vld [vmem:[%s1 + $0x38] sm:$0xf]
  %v96 = vld [vmem:[%s1 + $0x3c] sm:$0xf]
  %v161 = vunpack.c.l.b16 %v17
  %v162 = vunpack.c.l.b16 %v18
  %v163 = vunpack.c.l.b16 %v19
  %v164 = vunpack.c.l.b16 %v20
  %v165 = vunpack.c.l.b16 %v21
  %v166 = vunpack.c.l.b16 %v22
  %v167 = vunpack.c.l.b16 %v23
  %v168 = vunpack.c.l.b16 %v24
  %v169 = vunpack.c.l.b16 %v25
  %v170 = vunpack.c.l.b16 %v26
  %v171 = vunpack.c.l.b16 %v27
  %v172 = vunpack.c.l.b16 %v28
  %v173 = vunpack.c.l.b16 %v29
  %v174 = vunpack.c.l.b16 %v30
  %v175 = vunpack.c.l.b16 %v31
  %v176 = vunpack.c.l.b16 %v32
  %v177 = vunpack.c.l.b16 %v33
  %v178 = vunpack.c.l.b16 %v34
  %v179 = vunpack.c.l.b16 %v35
  %v180 = vunpack.c.l.b16 %v36
  %v181 = vunpack.c.l.b16 %v37
  %v182 = vunpack.c.l.b16 %v38
  %v183 = vunpack.c.l.b16 %v39
  %v184 = vunpack.c.l.b16 %v40
  %v185 = vunpack.c.l.b16 %v41
  %v186 = vunpack.c.l.b16 %v42
  %v187 = vunpack.c.l.b16 %v43
  %v188 = vunpack.c.l.b16 %v44
  %v189 = vunpack.c.l.b16 %v45
  %v190 = vunpack.c.l.b16 %v46
  %v191 = vunpack.c.l.b16 %v47
  %v192 = vunpack.c.l.b16 %v48
  %v193 = vunpack.c.l.b16 %v49
  %v194 = vunpack.c.l.b16 %v50
  %v195 = vunpack.c.l.b16 %v51
  %v196 = vunpack.c.l.b16 %v52
  %v197 = vunpack.c.l.b16 %v53
  %v198 = vunpack.c.l.b16 %v54
  %v199 = vunpack.c.l.b16 %v55
  %v200 = vunpack.c.l.b16 %v56
  %v201 = vunpack.c.l.b16 %v57
  %v202 = vunpack.c.l.b16 %v58
  %v203 = vunpack.c.l.b16 %v59
  %v204 = vunpack.c.l.b16 %v60
  %v205 = vunpack.c.l.b16 %v61
  %v206 = vunpack.c.l.b16 %v62
  %v207 = vunpack.c.l.b16 %v63
  %v208 = vunpack.c.l.b16 %v64
  %v209 = vunpack.c.l.b16 %v65
  %v210 = vunpack.c.l.b16 %v66
  %v211 = vunpack.c.l.b16 %v67
  %v212 = vunpack.c.l.b16 %v68
  %v213 = vunpack.c.l.b16 %v69
  %v214 = vunpack.c.l.b16 %v70
  %v215 = vunpack.c.l.b16 %v71
  %v216 = vunpack.c.l.b16 %v72
  %v217 = vunpack.c.l.b16 %v73
  %v218 = vunpack.c.l.b16 %v74
  %v219 = vunpack.c.l.b16 %v75
  %v220 = vunpack.c.l.b16 %v76
  %v221 = vunpack.c.l.b16 %v77
  %v222 = vunpack.c.l.b16 %v78
  %v223 = vunpack.c.l.b16 %v79
  %v224 = vunpack.c.l.b16 %v80
  %v225 = vpack.c.b16 %v162, %v161
  %v226 = vpack.c.b16 %v164, %v163
  %v227 = vpack.c.b16 %v166, %v165
  %v228 = vpack.c.b16 %v168, %v167
  %v229 = vpack.c.b16 %v170, %v169
  %v230 = vpack.c.b16 %v172, %v171
  %v231 = vpack.c.b16 %v174, %v173
  %v232 = vpack.c.b16 %v176, %v175
  %v233 = vpack.c.b16 %v178, %v177
  %v234 = vpack.c.b16 %v180, %v179
  %v235 = vpack.c.b16 %v182, %v181
  %v236 = vpack.c.b16 %v184, %v183
  %v237 = vpack.c.b16 %v186, %v185
  %v238 = vpack.c.b16 %v188, %v187
  %v239 = vpack.c.b16 %v190, %v189
  %v240 = vpack.c.b16 %v192, %v191
  %v241 = vpack.c.b16 %v194, %v193
  %v242 = vpack.c.b16 %v196, %v195
  %v243 = vpack.c.b16 %v198, %v197
  %v244 = vpack.c.b16 %v200, %v199
  %v245 = vpack.c.b16 %v202, %v201
  %v246 = vpack.c.b16 %v204, %v203
  %v247 = vpack.c.b16 %v206, %v205
  %v248 = vpack.c.b16 %v208, %v207
  %v249 = vpack.c.b16 %v210, %v209
  %v250 = vpack.c.b16 %v212, %v211
  %v251 = vpack.c.b16 %v214, %v213
  %v252 = vpack.c.b16 %v216, %v215
  %v253 = vpack.c.b16 %v218, %v217
  %v254 = vpack.c.b16 %v220, %v219
  %v255 = vpack.c.b16 %v222, %v221
  %v256 = vpack.c.b16 %v224, %v223
  %v305 = vunpack.c.l.b16 %v81
  %v306 = vunpack.c.l.b16 %v82
  %v307 = vunpack.c.l.b16 %v83
  %v308 = vunpack.c.l.b16 %v84
  %v309 = vunpack.c.l.b16 %v85
  %v310 = vunpack.c.l.b16 %v86
  %v311 = vunpack.c.l.b16 %v87
  %v312 = vunpack.c.l.b16 %v88
  %v313 = vunpack.c.l.b16 %v89
  %v314 = vunpack.c.l.b16 %v90
  %v315 = vunpack.c.l.b16 %v91
  %v316 = vunpack.c.l.b16 %v92
  %v317 = vunpack.c.l.b16 %v93
  %v318 = vunpack.c.l.b16 %v94
  %v319 = vunpack.c.l.b16 %v95
  %v320 = vunpack.c.l.b16 %v96
  %v321 = vpack.c.b16 %v306, %v305
  %v322 = vpack.c.b16 %v308, %v307
  %v323 = vpack.c.b16 %v310, %v309
  %v324 = vpack.c.b16 %v312, %v311
  %v325 = vpack.c.b16 %v314, %v313
  %v326 = vpack.c.b16 %v316, %v315
  %v327 = vpack.c.b16 %v318, %v317
  %v328 = vpack.c.b16 %v320, %v319
  %337 = vmatpush.bf16.msra.mxu0 %v328
  %338 = vmatpush.bf16.msra.mxu0 %v327
  %339 = vmatpush.bf16.msra.mxu0 %v326
  %340 = vmatpush.bf16.msra.mxu0 %v325
  %341 = vmatpush.bf16.msra.mxu0 %v324
  %342 = vmatpush.bf16.msra.mxu0 %v323
  %343 = vmatpush.bf16.msra.mxu0 %v322
  %344 = vmatpush.bf16.msra.mxu0 %v321
  %345 = vmatmul.bf16.gmra.mxu0 %v225
  %v346 = vpop.f32.mrf.mxu0
  %v347 = vadd.f32 0.0, %v346
  %v348 = vpop.f32.mrf.mxu0
  %v349 = vadd.f32 0.0, %v348
  %350 = vmatmul.bf16.gmra.mxu0 %v226
  %v351 = vpop.f32.mrf.mxu0
  %v352 = vadd.f32 0.0, %v351
  %v353 = vpop.f32.mrf.mxu0
  %v354 = vadd.f32 0.0, %v353
  %355 = vmatmul.bf16.gmra.mxu0 %v227
  %v356 = vpop.f32.mrf.mxu0
  %v357 = vadd.f32 0.0, %v356
  %v358 = vpop.f32.mrf.mxu0
  %v359 = vadd.f32 0.0, %v358
  %360 = vmatmul.bf16.gmra.mxu0 %v228
  %v361 = vpop.f32.mrf.mxu0
  %v362 = vadd.f32 0.0, %v361
  %v363 = vpop.f32.mrf.mxu0
  %v364 = vadd.f32 0.0, %v363
  %365 = vmatmul.bf16.gmra.mxu0 %v229
  %v366 = vpop.f32.mrf.mxu0
  %v367 = vadd.f32 0.0, %v366
  %v368 = vpop.f32.mrf.mxu0
  %v369 = vadd.f32 0.0, %v368
  %370 = vmatmul.bf16.gmra.mxu0 %v230
  %v371 = vpop.f32.mrf.mxu0
  %v372 = vadd.f32 0.0, %v371
  %v373 = vpop.f32.mrf.mxu0
  %v374 = vadd.f32 0.0, %v373
  %375 = vmatmul.bf16.gmra.mxu0 %v231
  %v376 = vpop.f32.mrf.mxu0
  %v377 = vadd.f32 0.0, %v376
  %v378 = vpop.f32.mrf.mxu0
  %v379 = vadd.f32 0.0, %v378
  %380 = vmatmul.bf16.gmra.mxu0 %v232
  %v381 = vpop.f32.mrf.mxu0
  %v382 = vadd.f32 0.0, %v381
  %v383 = vpop.f32.mrf.mxu0
  %v384 = vadd.f32 0.0, %v383
  %385 = vmatmul.bf16.gmra.mxu0 %v233
  %v386 = vpop.f32.mrf.mxu0
  %v387 = vadd.f32 0.0, %v386
  %v388 = vpop.f32.mrf.mxu0
  %v389 = vadd.f32 0.0, %v388
  %390 = vmatmul.bf16.gmra.mxu0 %v234
  %v391 = vpop.f32.mrf.mxu0
  %v392 = vadd.f32 0.0, %v391
  %v393 = vpop.f32.mrf.mxu0
  %v394 = vadd.f32 0.0, %v393
  %395 = vmatmul.bf16.gmra.mxu0 %v235
  %v396 = vpop.f32.mrf.mxu0
  %v397 = vadd.f32 0.0, %v396
  %v398 = vpop.f32.mrf.mxu0
  %v399 = vadd.f32 0.0, %v398
  %400 = vmatmul.bf16.gmra.mxu0 %v236
  %v401 = vpop.f32.mrf.mxu0
  %v402 = vadd.f32 0.0, %v401
  %v403 = vpop.f32.mrf.mxu0
  %v404 = vadd.f32 0.0, %v403
  %405 = vmatmul.bf16.gmra.mxu0 %v237
  %v406 = vpop.f32.mrf.mxu0
  %v407 = vadd.f32 0.0, %v406
  %v408 = vpop.f32.mrf.mxu0
  %v409 = vadd.f32 0.0, %v408
  %410 = vmatmul.bf16.gmra.mxu0 %v238
  %v411 = vpop.f32.mrf.mxu0
  %v412 = vadd.f32 0.0, %v411
  %v413 = vpop.f32.mrf.mxu0
  %v414 = vadd.f32 0.0, %v413
  %415 = vmatmul.bf16.gmra.mxu0 %v239
  %v416 = vpop.f32.mrf.mxu0
  %v417 = vadd.f32 0.0, %v416
  %v418 = vpop.f32.mrf.mxu0
  %v419 = vadd.f32 0.0, %v418
  %420 = vmatmul.bf16.gmra.mxu0 %v240
  %v421 = vpop.f32.mrf.mxu0
  %v422 = vadd.f32 0.0, %v421
  %v423 = vpop.f32.mrf.mxu0
  %v424 = vadd.f32 0.0, %v423
  %425 = vmatmul.bf16.gmra.mxu0 %v241
  %v426 = vpop.f32.mrf.mxu0
  %v427 = vadd.f32 0.0, %v426
  %v428 = vpop.f32.mrf.mxu0
  %v429 = vadd.f32 0.0, %v428
  %430 = vmatmul.bf16.gmra.mxu0 %v242
  %v431 = vpop.f32.mrf.mxu0
  %v432 = vadd.f32 0.0, %v431
  %v433 = vpop.f32.mrf.mxu0
  %v434 = vadd.f32 0.0, %v433
  %435 = vmatmul.bf16.gmra.mxu0 %v243
  %v436 = vpop.f32.mrf.mxu0
  %v437 = vadd.f32 0.0, %v436
  %v438 = vpop.f32.mrf.mxu0
  %v439 = vadd.f32 0.0, %v438
  %440 = vmatmul.bf16.gmra.mxu0 %v244
  %v441 = vpop.f32.mrf.mxu0
  %v442 = vadd.f32 0.0, %v441
  %v443 = vpop.f32.mrf.mxu0
  %v444 = vadd.f32 0.0, %v443
  %445 = vmatmul.bf16.gmra.mxu0 %v245
  %v446 = vpop.f32.mrf.mxu0
  %v447 = vadd.f32 0.0, %v446
  %v448 = vpop.f32.mrf.mxu0
  %v449 = vadd.f32 0.0, %v448
  %450 = vmatmul.bf16.gmra.mxu0 %v246
  %v451 = vpop.f32.mrf.mxu0
  %v452 = vadd.f32 0.0, %v451
  %v453 = vpop.f32.mrf.mxu0
  %v454 = vadd.f32 0.0, %v453
  %455 = vmatmul.bf16.gmra.mxu0 %v247
  %v456 = vpop.f32.mrf.mxu0
  %v457 = vadd.f32 0.0, %v456
  %v458 = vpop.f32.mrf.mxu0
  %v459 = vadd.f32 0.0, %v458
  %460 = vmatmul.bf16.gmra.mxu0 %v248
  %v461 = vpop.f32.mrf.mxu0
  %v462 = vadd.f32 0.0, %v461
  %v463 = vpop.f32.mrf.mxu0
  %v464 = vadd.f32 0.0, %v463
  %465 = vmatmul.bf16.gmra.mxu0 %v249
  %v466 = vpop.f32.mrf.mxu0
  %v467 = vadd.f32 0.0, %v466
  %v468 = vpop.f32.mrf.mxu0
  %v469 = vadd.f32 0.0, %v468
  %470 = vmatmul.bf16.gmra.mxu0 %v250
  %v471 = vpop.f32.mrf.mxu0
  %v472 = vadd.f32 0.0, %v471
  %v473 = vpop.f32.mrf.mxu0
  %v474 = vadd.f32 0.0, %v473
  %475 = vmatmul.bf16.gmra.mxu0 %v251
  %v476 = vpop.f32.mrf.mxu0
  %v477 = vadd.f32 0.0, %v476
  %v478 = vpop.f32.mrf.mxu0
  %v479 = vadd.f32 0.0, %v478
  %480 = vmatmul.bf16.gmra.mxu0 %v252
  %v481 = vpop.f32.mrf.mxu0
  %v482 = vadd.f32 0.0, %v481
  %v483 = vpop.f32.mrf.mxu0
  %v484 = vadd.f32 0.0, %v483
  %485 = vmatmul.bf16.gmra.mxu0 %v253
  %v486 = vpop.f32.mrf.mxu0
  %v487 = vadd.f32 0.0, %v486
  %v488 = vpop.f32.mrf.mxu0
  %v489 = vadd.f32 0.0, %v488
  %490 = vmatmul.bf16.gmra.mxu0 %v254
  %v491 = vpop.f32.mrf.mxu0
  %v492 = vadd.f32 0.0, %v491
  %v493 = vpop.f32.mrf.mxu0
  %v494 = vadd.f32 0.0, %v493
  %495 = vmatmul.bf16.gmra.mxu0 %v255
  %v496 = vpop.f32.mrf.mxu0
  %v497 = vadd.f32 0.0, %v496
  %v498 = vpop.f32.mrf.mxu0
  %v499 = vadd.f32 0.0, %v498
  %500 = vmatmul.bf16.gmra.mxu0 %v256
  %v501 = vpop.f32.mrf.mxu0
  %v502 = vadd.f32 0.0, %v501
  %v503 = vpop.f32.mrf.mxu0
  %v504 = vadd.f32 0.0, %v503
  %505 = vdwg.mxu0
  %vm506 = vcmask 64512
  %v507 = vsel %vm506, %v347, 0.0
  %v508 = vsel %vm506, %v349, 0.0
  %v509 = vadd.f32 %v507, %v508
  %v510 = vsel %vm506, %v352, 0.0
  %v511 = vadd.f32 %v509, %v510
  %v512 = vsel %vm506, %v354, 0.0
  %v513 = vadd.f32 %v511, %v512
  %v514 = vsel %vm506, %v357, 0.0
  %v515 = vadd.f32 %v513, %v514
  %v516 = vsel %vm506, %v359, 0.0
  %v517 = vadd.f32 %v515, %v516
  %v518 = vsel %vm506, %v362, 0.0
  %v519 = vadd.f32 %v517, %v518
  %v520 = vsel %vm506, %v364, 0.0
  %v521 = vadd.f32 %v519, %v520
  %v522 = vsel %vm506, %v367, 0.0
  %v523 = vadd.f32 %v521, %v522
  %v524 = vsel %vm506, %v369, 0.0
  %v525 = vadd.f32 %v523, %v524
  %v526 = vsel %vm506, %v372, 0.0
  %v527 = vadd.f32 %v525, %v526
  %v528 = vsel %vm506, %v374, 0.0
  %v529 = vadd.f32 %v527, %v528
  %v530 = vsel %vm506, %v377, 0.0
  %v531 = vadd.f32 %v529, %v530
  %v532 = vsel %vm506, %v379, 0.0
  %v533 = vadd.f32 %v531, %v532
  %v534 = vsel %vm506, %v382, 0.0
  %v535 = vadd.f32 %v533, %v534
  %v536 = vsel %vm506, %v384, 0.0
  %v537 = vadd.f32 %v535, %v536
  %v538 = vsel %vm506, %v387, 0.0
  %v539 = vadd.f32 %v537, %v538
  %v540 = vsel %vm506, %v389, 0.0
  %v541 = vadd.f32 %v539, %v540
  %v542 = vsel %vm506, %v392, 0.0
  %v543 = vadd.f32 %v541, %v542
  %v544 = vsel %vm506, %v394, 0.0
  %v545 = vadd.f32 %v543, %v544
  %v546 = vsel %vm506, %v397, 0.0
  %v547 = vadd.f32 %v545, %v546
  %v548 = vsel %vm506, %v399, 0.0
  %v549 = vadd.f32 %v547, %v548
  %v550 = vsel %vm506, %v402, 0.0
  %v551 = vadd.f32 %v549, %v550
  %v552 = vsel %vm506, %v404, 0.0
  %v553 = vadd.f32 %v551, %v552
  %v554 = vsel %vm506, %v407, 0.0
  %v555 = vadd.f32 %v553, %v554
  %v556 = vsel %vm506, %v409, 0.0
  %v557 = vadd.f32 %v555, %v556
  %v558 = vsel %vm506, %v412, 0.0
  %v559 = vadd.f32 %v557, %v558
  %v560 = vsel %vm506, %v414, 0.0
  %v561 = vadd.f32 %v559, %v560
  %v562 = vsel %vm506, %v417, 0.0
  %v563 = vadd.f32 %v561, %v562
  %v564 = vsel %vm506, %v419, 0.0
  %v565 = vadd.f32 %v563, %v564
  %v566 = vsel %vm506, %v422, 0.0
  %v567 = vadd.f32 %v565, %v566
  %v568 = vsel %vm506, %v424, 0.0
  %v569 = vadd.f32 %v567, %v568
  %v570 = vsel %vm506, %v427, 0.0
  %v571 = vadd.f32 %v569, %v570
  %v572 = vsel %vm506, %v429, 0.0
  %v573 = vadd.f32 %v571, %v572
  %v574 = vsel %vm506, %v432, 0.0
  %v575 = vadd.f32 %v573, %v574
  %v576 = vsel %vm506, %v434, 0.0
  %v577 = vadd.f32 %v575, %v576
  %v578 = vsel %vm506, %v437, 0.0
  %v579 = vadd.f32 %v577, %v578
  %v580 = vsel %vm506, %v439, 0.0
  %v581 = vadd.f32 %v579, %v580
  %v582 = vsel %vm506, %v442, 0.0
  %v583 = vadd.f32 %v581, %v582
  %v584 = vsel %vm506, %v444, 0.0
  %v585 = vadd.f32 %v583, %v584
  %v586 = vsel %vm506, %v447, 0.0
  %v587 = vadd.f32 %v585, %v586
  %v588 = vsel %vm506, %v449, 0.0
  %v589 = vadd.f32 %v587, %v588
  %v590 = vsel %vm506, %v452, 0.0
  %v591 = vadd.f32 %v589, %v590
  %v592 = vsel %vm506, %v454, 0.0
  %v593 = vadd.f32 %v591, %v592
  %v594 = vsel %vm506, %v457, 0.0
  %v595 = vadd.f32 %v593, %v594
  %v596 = vsel %vm506, %v459, 0.0
  %v597 = vadd.f32 %v595, %v596
  %v598 = vsel %vm506, %v462, 0.0
  %v599 = vadd.f32 %v597, %v598
  %v600 = vsel %vm506, %v464, 0.0
  %v601 = vadd.f32 %v599, %v600
  %v602 = vsel %vm506, %v467, 0.0
  %v603 = vadd.f32 %v601, %v602
  %v604 = vsel %vm506, %v469, 0.0
  %v605 = vadd.f32 %v603, %v604
  %v606 = vsel %vm506, %v472, 0.0
  %v607 = vadd.f32 %v605, %v606
  %v608 = vsel %vm506, %v474, 0.0
  %v609 = vadd.f32 %v607, %v608
  %v610 = vsel %vm506, %v477, 0.0
  %v611 = vadd.f32 %v609, %v610
  %v612 = vsel %vm506, %v479, 0.0
  %v613 = vadd.f32 %v611, %v612
  %v614 = vsel %vm506, %v482, 0.0
  %v615 = vadd.f32 %v613, %v614
  %v616 = vsel %vm506, %v484, 0.0
  %v617 = vadd.f32 %v615, %v616
  %v618 = vsel %vm506, %v487, 0.0
  %v619 = vadd.f32 %v617, %v618
  %v620 = vsel %vm506, %v489, 0.0
  %v621 = vadd.f32 %v619, %v620
  %v622 = vsel %vm506, %v492, 0.0
  %v623 = vadd.f32 %v621, %v622
  %v624 = vsel %vm506, %v494, 0.0
  %v625 = vadd.f32 %v623, %v624
  %v626 = vsel %vm506, %v497, 0.0
  %v627 = vadd.f32 %v625, %v626
  %v628 = vsel %vm506, %v499, 0.0
  %v629 = vadd.f32 %v627, %v628
  %v630 = vsel %vm506, %v502, 0.0
  %v631 = vadd.f32 %v629, %v630
  %v632 = vsel %vm506, %v504, 0.0
  %v633 = vadd.f32 %v631, %v632
  %v634 = vrot.slane %v633, 4
  %v635 = vadd.f32 %v633, %v634
  %v636 = vrot.slane %v635, 2
  %v637 = vadd.f32 %v635, %v636
  %v638 = vrot.slane %v637, 1
  %v639 = vadd.f32 %v637, %v638
  %v640 = vmul.f32 %v639, 0.001953125
  %v641 = vsub.f32 %v347, %v640
  %v642 = vsub.f32 %v349, %v640
  %v643 = vsub.f32 %v352, %v640
  %v644 = vsub.f32 %v354, %v640
  %v645 = vsub.f32 %v357, %v640
  %v646 = vsub.f32 %v359, %v640
  %v647 = vsub.f32 %v362, %v640
  %v648 = vsub.f32 %v364, %v640
  %v649 = vsub.f32 %v367, %v640
  %v650 = vsub.f32 %v369, %v640
  %v651 = vsub.f32 %v372, %v640
  %v652 = vsub.f32 %v374, %v640
  %v653 = vsub.f32 %v377, %v640
  %v654 = vsub.f32 %v379, %v640
  %v655 = vsub.f32 %v382, %v640
  %v656 = vsub.f32 %v384, %v640
  %v657 = vsub.f32 %v387, %v640
  %v658 = vsub.f32 %v389, %v640
  %v659 = vsub.f32 %v392, %v640
  %v660 = vsub.f32 %v394, %v640
  %v661 = vsub.f32 %v397, %v640
  %v662 = vsub.f32 %v399, %v640
  %v663 = vsub.f32 %v402, %v640
  %v664 = vsub.f32 %v404, %v640
  %v665 = vsub.f32 %v407, %v640
  %v666 = vsub.f32 %v409, %v640
  %v667 = vsub.f32 %v412, %v640
  %v668 = vsub.f32 %v414, %v640
  %v669 = vsub.f32 %v417, %v640
  %v670 = vsub.f32 %v419, %v640
  %v671 = vsub.f32 %v422, %v640
  %v672 = vsub.f32 %v424, %v640
  %v673 = vsub.f32 %v427, %v640
  %v674 = vsub.f32 %v429, %v640
  %v675 = vsub.f32 %v432, %v640
  %v676 = vsub.f32 %v434, %v640
  %v677 = vsub.f32 %v437, %v640
  %v678 = vsub.f32 %v439, %v640
  %v679 = vsub.f32 %v442, %v640
  %v680 = vsub.f32 %v444, %v640
  %v681 = vsub.f32 %v447, %v640
  %v682 = vsub.f32 %v449, %v640
  %v683 = vsub.f32 %v452, %v640
  %v684 = vsub.f32 %v454, %v640
  %v685 = vsub.f32 %v457, %v640
  %v686 = vsub.f32 %v459, %v640
  %v687 = vsub.f32 %v462, %v640
  %v688 = vsub.f32 %v464, %v640
  %v689 = vsub.f32 %v467, %v640
  %v690 = vsub.f32 %v469, %v640
  %v691 = vsub.f32 %v472, %v640
  %v692 = vsub.f32 %v474, %v640
  %v693 = vsub.f32 %v477, %v640
  %v694 = vsub.f32 %v479, %v640
  %v695 = vsub.f32 %v482, %v640
  %v696 = vsub.f32 %v484, %v640
  %v697 = vsub.f32 %v487, %v640
  %v698 = vsub.f32 %v489, %v640
  %v699 = vsub.f32 %v492, %v640
  %v700 = vsub.f32 %v494, %v640
  %v701 = vsub.f32 %v497, %v640
  %v702 = vsub.f32 %v499, %v640
  %v703 = vsub.f32 %v502, %v640
  %v704 = vsub.f32 %v504, %v640
  %v705 = vmul.f32 %v641, %v641
  %v706 = vmul.f32 %v642, %v642
  %v707 = vmul.f32 %v643, %v643
  %v708 = vmul.f32 %v644, %v644
  %v709 = vmul.f32 %v645, %v645
  %v710 = vmul.f32 %v646, %v646
  %v711 = vmul.f32 %v647, %v647
  %v712 = vmul.f32 %v648, %v648
  %v713 = vmul.f32 %v649, %v649
  %v714 = vmul.f32 %v650, %v650
  %v715 = vmul.f32 %v651, %v651
  %v716 = vmul.f32 %v652, %v652
  %v717 = vmul.f32 %v653, %v653
  %v718 = vmul.f32 %v654, %v654
  %v719 = vmul.f32 %v655, %v655
  %v720 = vmul.f32 %v656, %v656
  %v721 = vmul.f32 %v657, %v657
  %v722 = vmul.f32 %v658, %v658
  %v723 = vmul.f32 %v659, %v659
  %v724 = vmul.f32 %v660, %v660
  %v725 = vmul.f32 %v661, %v661
  %v726 = vmul.f32 %v662, %v662
  %v727 = vmul.f32 %v663, %v663
  %v728 = vmul.f32 %v664, %v664
  %v729 = vmul.f32 %v665, %v665
  %v730 = vmul.f32 %v666, %v666
  %v731 = vmul.f32 %v667, %v667
  %v732 = vmul.f32 %v668, %v668
  %v733 = vmul.f32 %v669, %v669
  %v734 = vmul.f32 %v670, %v670
  %v735 = vmul.f32 %v671, %v671
  %v736 = vmul.f32 %v672, %v672
  %v737 = vmul.f32 %v673, %v673
  %v738 = vmul.f32 %v674, %v674
  %v739 = vmul.f32 %v675, %v675
  %v740 = vmul.f32 %v676, %v676
  %v741 = vmul.f32 %v677, %v677
  %v742 = vmul.f32 %v678, %v678
  %v743 = vmul.f32 %v679, %v679
  %v744 = vmul.f32 %v680, %v680
  %v745 = vmul.f32 %v681, %v681
  %v746 = vmul.f32 %v682, %v682
  %v747 = vmul.f32 %v683, %v683
  %v748 = vmul.f32 %v684, %v684
  %v749 = vmul.f32 %v685, %v685
  %v750 = vmul.f32 %v686, %v686
  %v751 = vmul.f32 %v687, %v687
  %v752 = vmul.f32 %v688, %v688
  %v753 = vmul.f32 %v689, %v689
  %v754 = vmul.f32 %v690, %v690
  %v755 = vmul.f32 %v691, %v691
  %v756 = vmul.f32 %v692, %v692
  %v757 = vmul.f32 %v693, %v693
  %v758 = vmul.f32 %v694, %v694
  %v759 = vmul.f32 %v695, %v695
  %v760 = vmul.f32 %v696, %v696
  %v761 = vmul.f32 %v697, %v697
  %v762 = vmul.f32 %v698, %v698
  %v763 = vmul.f32 %v699, %v699
  %v764 = vmul.f32 %v700, %v700
  %v765 = vmul.f32 %v701, %v701
  %v766 = vmul.f32 %v702, %v702
  %v767 = vmul.f32 %v703, %v703
  %v768 = vmul.f32 %v704, %v704
  %v769 = vsel %vm506, %v705, 0.0
  %v770 = vsel %vm506, %v706, 0.0
  %v771 = vadd.f32 %v769, %v770
  %v772 = vsel %vm506, %v707, 0.0
  %v773 = vadd.f32 %v771, %v772
  %v774 = vsel %vm506, %v708, 0.0
  %v775 = vadd.f32 %v773, %v774
  %v776 = vsel %vm506, %v709, 0.0
  %v777 = vadd.f32 %v775, %v776
  %v778 = vsel %vm506, %v710, 0.0
  %v779 = vadd.f32 %v777, %v778
  %v780 = vsel %vm506, %v711, 0.0
  %v781 = vadd.f32 %v779, %v780
  %v782 = vsel %vm506, %v712, 0.0
  %v783 = vadd.f32 %v781, %v782
  %v784 = vsel %vm506, %v713, 0.0
  %v785 = vadd.f32 %v783, %v784
  %v786 = vsel %vm506, %v714, 0.0
  %v787 = vadd.f32 %v785, %v786
  %v788 = vsel %vm506, %v715, 0.0
  %v789 = vadd.f32 %v787, %v788
  %v790 = vsel %vm506, %v716, 0.0
  %v791 = vadd.f32 %v789, %v790
  %v792 = vsel %vm506, %v717, 0.0
  %v793 = vadd.f32 %v791, %v792
  %v794 = vsel %vm506, %v718, 0.0
  %v795 = vadd.f32 %v793, %v794
  %v796 = vsel %vm506, %v719, 0.0
  %v797 = vadd.f32 %v795, %v796
  %v798 = vsel %vm506, %v720, 0.0
  %v799 = vadd.f32 %v797, %v798
  %v800 = vsel %vm506, %v721, 0.0
  %v801 = vadd.f32 %v799, %v800
  %v802 = vsel %vm506, %v722, 0.0
  %v803 = vadd.f32 %v801, %v802
  %v804 = vsel %vm506, %v723, 0.0
  %v805 = vadd.f32 %v803, %v804
  %v806 = vsel %vm506, %v724, 0.0
  %v807 = vadd.f32 %v805, %v806
  %v808 = vsel %vm506, %v725, 0.0
  %v809 = vadd.f32 %v807, %v808
  %v810 = vsel %vm506, %v726, 0.0
  %v811 = vadd.f32 %v809, %v810
  %v812 = vsel %vm506, %v727, 0.0
  %v813 = vadd.f32 %v811, %v812
  %v814 = vsel %vm506, %v728, 0.0
  %v815 = vadd.f32 %v813, %v814
  %v816 = vsel %vm506, %v729, 0.0
  %v817 = vadd.f32 %v815, %v816
  %v818 = vsel %vm506, %v730, 0.0
  %v819 = vadd.f32 %v817, %v818
  %v820 = vsel %vm506, %v731, 0.0
  %v821 = vadd.f32 %v819, %v820
  %v822 = vsel %vm506, %v732, 0.0
  %v823 = vadd.f32 %v821, %v822
  %v824 = vsel %vm506, %v733, 0.0
  %v825 = vadd.f32 %v823, %v824
  %v826 = vsel %vm506, %v734, 0.0
  %v827 = vadd.f32 %v825, %v826
  %v828 = vsel %vm506, %v735, 0.0
  %v829 = vadd.f32 %v827, %v828
  %v830 = vsel %vm506, %v736, 0.0
  %v831 = vadd.f32 %v829, %v830
  %v832 = vsel %vm506, %v737, 0.0
  %v833 = vadd.f32 %v831, %v832
  %v834 = vsel %vm506, %v738, 0.0
  %v835 = vadd.f32 %v833, %v834
  %v836 = vsel %vm506, %v739, 0.0
  %v837 = vadd.f32 %v835, %v836
  %v838 = vsel %vm506, %v740, 0.0
  %v839 = vadd.f32 %v837, %v838
  %v840 = vsel %vm506, %v741, 0.0
  %v841 = vadd.f32 %v839, %v840
  %v842 = vsel %vm506, %v742, 0.0
  %v843 = vadd.f32 %v841, %v842
  %v844 = vsel %vm506, %v743, 0.0
  %v845 = vadd.f32 %v843, %v844
  %v846 = vsel %vm506, %v744, 0.0
  %v847 = vadd.f32 %v845, %v846
  %v848 = vsel %vm506, %v745, 0.0
  %v849 = vadd.f32 %v847, %v848
  %v850 = vsel %vm506, %v746, 0.0
  %v851 = vadd.f32 %v849, %v850
  %v852 = vsel %vm506, %v747, 0.0
  %v853 = vadd.f32 %v851, %v852
  %v854 = vsel %vm506, %v748, 0.0
  %v855 = vadd.f32 %v853, %v854
  %v856 = vsel %vm506, %v749, 0.0
  %v857 = vadd.f32 %v855, %v856
  %v858 = vsel %vm506, %v750, 0.0
  %v859 = vadd.f32 %v857, %v858
  %v860 = vsel %vm506, %v751, 0.0
  %v861 = vadd.f32 %v859, %v860
  %v862 = vsel %vm506, %v752, 0.0
  %v863 = vadd.f32 %v861, %v862
  %v864 = vsel %vm506, %v753, 0.0
  %v865 = vadd.f32 %v863, %v864
  %v866 = vsel %vm506, %v754, 0.0
  %v867 = vadd.f32 %v865, %v866
  %v868 = vsel %vm506, %v755, 0.0
  %v869 = vadd.f32 %v867, %v868
  %v870 = vsel %vm506, %v756, 0.0
  %v871 = vadd.f32 %v869, %v870
  %v872 = vsel %vm506, %v757, 0.0
  %v873 = vadd.f32 %v871, %v872
  %v874 = vsel %vm506, %v758, 0.0
  %v875 = vadd.f32 %v873, %v874
  %v876 = vsel %vm506, %v759, 0.0
  %v877 = vadd.f32 %v875, %v876
  %v878 = vsel %vm506, %v760, 0.0
  %v879 = vadd.f32 %v877, %v878
  %v880 = vsel %vm506, %v761, 0.0
  %v881 = vadd.f32 %v879, %v880
  %v882 = vsel %vm506, %v762, 0.0
  %v883 = vadd.f32 %v881, %v882
  %v884 = vsel %vm506, %v763, 0.0
  %v885 = vadd.f32 %v883, %v884
  %v886 = vsel %vm506, %v764, 0.0
  %v887 = vadd.f32 %v885, %v886
  %v888 = vsel %vm506, %v765, 0.0
  %v889 = vadd.f32 %v887, %v888
  %v890 = vsel %vm506, %v766, 0.0
  %v891 = vadd.f32 %v889, %v890
  %v892 = vsel %vm506, %v767, 0.0
  %v893 = vadd.f32 %v891, %v892
  %v894 = vsel %vm506, %v768, 0.0
  %v895 = vadd.f32 %v893, %v894
  %v896 = vrot.slane %v895, 4
  %v897 = vadd.f32 %v895, %v896
  %v898 = vrot.slane %v897, 2
  %v899 = vadd.f32 %v897, %v898
  %v900 = vrot.slane %v899, 1
  %v901 = vadd.f32 %v899, %v900
  %v902 = vmul.f32 %v901, 0.001953125
  %v903 = vld [vmem:[%s2] sm:$0x1]
  %v904 = vadd.f32 %v902, 1e-05
  %v905 = vrsqrt.pop %v904
  %v906 = vmul.f32 %v905, %v904
  %v907 = vmul.f32 %v906, %v905
  %v908 = vmul.f32 0.5, %v907
  %v909 = vsub.f32 1.5, %v908
  %v910 = vmul.f32 %v905, %v909
  %vm911 = vweird.f32 %v904
  %vm912 = vweird.f32 %v905
  %vm913 = vmor %vm911, %vm912
  %v914 = vsel %vm913, %v905, %v910
  %v915 = vmul.f32 %v903, %v914
  %v917 = vperm.slane %v915, 0
  %v919 = vmul.f32 %v641, %v917
  %v920 = vmul.f32 %v642, %v917
  %v921 = vmul.f32 %v643, %v917
  %v922 = vmul.f32 %v644, %v917
  %v923 = vmul.f32 %v645, %v917
  %v924 = vmul.f32 %v646, %v917
  %v925 = vmul.f32 %v647, %v917
  %v926 = vmul.f32 %v648, %v917
  %v927 = vmul.f32 %v649, %v917
  %v928 = vmul.f32 %v650, %v917
  %v929 = vmul.f32 %v651, %v917
  %v930 = vmul.f32 %v652, %v917
  %v931 = vmul.f32 %v653, %v917
  %v932 = vmul.f32 %v654, %v917
  %v933 = vmul.f32 %v655, %v917
  %v934 = vmul.f32 %v656, %v917
  %v935 = vmul.f32 %v657, %v917
  %v936 = vmul.f32 %v658, %v917
  %v937 = vmul.f32 %v659, %v917
  %v938 = vmul.f32 %v660, %v917
  %v939 = vmul.f32 %v661, %v917
  %v940 = vmul.f32 %v662, %v917
  %v941 = vmul.f32 %v663, %v917
  %v942 = vmul.f32 %v664, %v917
  %v943 = vmul.f32 %v665, %v917
  %v944 = vmul.f32 %v666, %v917
  %v945 = vmul.f32 %v667, %v917
  %v946 = vmul.f32 %v668, %v917
  %v947 = vmul.f32 %v669, %v917
  %v948 = vmul.f32 %v670, %v917
  %v949 = vmul.f32 %v671, %v917
  %v950 = vmul.f32 %v672, %v917
  %v951 = vmul.f32 %v673, %v917
  %v952 = vmul.f32 %v674, %v917
  %v953 = vmul.f32 %v675, %v917
  %v954 = vmul.f32 %v676, %v917
  %v955 = vmul.f32 %v677, %v917
  %v956 = vmul.f32 %v678, %v917
  %v957 = vmul.f32 %v679, %v917
  %v958 = vmul.f32 %v680, %v917
  %v959 = vmul.f32 %v681, %v917
  %v960 = vmul.f32 %v682, %v917
  %v961 = vmul.f32 %v683, %v917
  %v962 = vmul.f32 %v684, %v917
  %v963 = vmul.f32 %v685, %v917
  %v964 = vmul.f32 %v686, %v917
  %v965 = vmul.f32 %v687, %v917
  %v966 = vmul.f32 %v688, %v917
  %v967 = vmul.f32 %v689, %v917
  %v968 = vmul.f32 %v690, %v917
  %v969 = vmul.f32 %v691, %v917
  %v970 = vmul.f32 %v692, %v917
  %v971 = vmul.f32 %v693, %v917
  %v972 = vmul.f32 %v694, %v917
  %v973 = vmul.f32 %v695, %v917
  %v974 = vmul.f32 %v696, %v917
  %v975 = vmul.f32 %v697, %v917
  %v976 = vmul.f32 %v698, %v917
  %v977 = vmul.f32 %v699, %v917
  %v978 = vmul.f32 %v700, %v917
  %v979 = vmul.f32 %v701, %v917
  %v980 = vmul.f32 %v702, %v917
  %v981 = vmul.f32 %v703, %v917
  %v982 = vmul.f32 %v704, %v917
  %v983 = vld [vmem:[%s3] sm:$0x1]
  %v985 = vperm.slane %v983, 0
  %v987 = vadd.f32 %v919, %v985
  %v988 = vadd.f32 %v920, %v985
  %v989 = vadd.f32 %v921, %v985
  %v990 = vadd.f32 %v922, %v985
  %v991 = vadd.f32 %v923, %v985
  %v992 = vadd.f32 %v924, %v985
  %v993 = vadd.f32 %v925, %v985
  %v994 = vadd.f32 %v926, %v985
  %v995 = vadd.f32 %v927, %v985
  %v996 = vadd.f32 %v928, %v985
  %v997 = vadd.f32 %v929, %v985
  %v998 = vadd.f32 %v930, %v985
  %v999 = vadd.f32 %v931, %v985
  %v1000 = vadd.f32 %v932, %v985
  %v1001 = vadd.f32 %v933, %v985
  %v1002 = vadd.f32 %v934, %v985
  %v1003 = vadd.f32 %v935, %v985
  %v1004 = vadd.f32 %v936, %v985
  %v1005 = vadd.f32 %v937, %v985
  %v1006 = vadd.f32 %v938, %v985
  %v1007 = vadd.f32 %v939, %v985
  %v1008 = vadd.f32 %v940, %v985
  %v1009 = vadd.f32 %v941, %v985
  %v1010 = vadd.f32 %v942, %v985
  %v1011 = vadd.f32 %v943, %v985
  %v1012 = vadd.f32 %v944, %v985
  %v1013 = vadd.f32 %v945, %v985
  %v1014 = vadd.f32 %v946, %v985
  %v1015 = vadd.f32 %v947, %v985
  %v1016 = vadd.f32 %v948, %v985
  %v1017 = vadd.f32 %v949, %v985
  %v1018 = vadd.f32 %v950, %v985
  %v1019 = vadd.f32 %v951, %v985
  %v1020 = vadd.f32 %v952, %v985
  %v1021 = vadd.f32 %v953, %v985
  %v1022 = vadd.f32 %v954, %v985
  %v1023 = vadd.f32 %v955, %v985
  %v1024 = vadd.f32 %v956, %v985
  %v1025 = vadd.f32 %v957, %v985
  %v1026 = vadd.f32 %v958, %v985
  %v1027 = vadd.f32 %v959, %v985
  %v1028 = vadd.f32 %v960, %v985
  %v1029 = vadd.f32 %v961, %v985
  %v1030 = vadd.f32 %v962, %v985
  %v1031 = vadd.f32 %v963, %v985
  %v1032 = vadd.f32 %v964, %v985
  %v1033 = vadd.f32 %v965, %v985
  %v1034 = vadd.f32 %v966, %v985
  %v1035 = vadd.f32 %v967, %v985
  %v1036 = vadd.f32 %v968, %v985
  %v1037 = vadd.f32 %v969, %v985
  %v1038 = vadd.f32 %v970, %v985
  %v1039 = vadd.f32 %v971, %v985
  %v1040 = vadd.f32 %v972, %v985
  %v1041 = vadd.f32 %v973, %v985
  %v1042 = vadd.f32 %v974, %v985
  %v1043 = vadd.f32 %v975, %v985
  %v1044 = vadd.f32 %v976, %v985
  %v1045 = vadd.f32 %v977, %v985
  %v1046 = vadd.f32 %v978, %v985
  %v1047 = vadd.f32 %v979, %v985
  %v1048 = vadd.f32 %v980, %v985
  %v1049 = vadd.f32 %v981, %v985
  %v1050 = vadd.f32 %v982, %v985
  %v1051 = vmin.f32 %v987, 20.0
  %v1052 = vmin.f32 %v988, 20.0
  %v1053 = vmin.f32 %v989, 20.0
  %v1054 = vmin.f32 %v990, 20.0
  %v1055 = vmin.f32 %v991, 20.0
  %v1056 = vmin.f32 %v992, 20.0
  %v1057 = vmin.f32 %v993, 20.0
  %v1058 = vmin.f32 %v994, 20.0
  %v1059 = vmin.f32 %v995, 20.0
  %v1060 = vmin.f32 %v996, 20.0
  %v1061 = vmin.f32 %v997, 20.0
  %v1062 = vmin.f32 %v998, 20.0
  %v1063 = vmin.f32 %v999, 20.0
  %v1064 = vmin.f32 %v1000, 20.0
  %v1065 = vmin.f32 %v1001, 20.0
  %v1066 = vmin.f32 %v1002, 20.0
  %v1067 = vmin.f32 %v1003, 20.0
  %v1068 = vmin.f32 %v1004, 20.0
  %v1069 = vmin.f32 %v1005, 20.0
  %v1070 = vmin.f32 %v1006, 20.0
  %v1071 = vmin.f32 %v1007, 20.0
  %v1072 = vmin.f32 %v1008, 20.0
  %v1073 = vmin.f32 %v1009, 20.0
  %v1074 = vmin.f32 %v1010, 20.0
  %v1075 = vmin.f32 %v1011, 20.0
  %v1076 = vmin.f32 %v1012, 20.0
  %v1077 = vmin.f32 %v1013, 20.0
  %v1078 = vmin.f32 %v1014, 20.0
  %v1079 = vmin.f32 %v1015, 20.0
  %v1080 = vmin.f32 %v1016, 20.0
  %v1081 = vmin.f32 %v1017, 20.0
  %v1082 = vmin.f32 %v1018, 20.0
  %v1083 = vmin.f32 %v1019, 20.0
  %v1084 = vmin.f32 %v1020, 20.0
  %v1085 = vmin.f32 %v1021, 20.0
  %v1086 = vmin.f32 %v1022, 20.0
  %v1087 = vmin.f32 %v1023, 20.0
  %v1088 = vmin.f32 %v1024, 20.0
  %v1089 = vmin.f32 %v1025, 20.0
  %v1090 = vmin.f32 %v1026, 20.0
  %v1091 = vmin.f32 %v1027, 20.0
  %v1092 = vmin.f32 %v1028, 20.0
  %v1093 = vmin.f32 %v1029, 20.0
  %v1094 = vmin.f32 %v1030, 20.0
  %v1095 = vmin.f32 %v1031, 20.0
  %v1096 = vmin.f32 %v1032, 20.0
  %v1097 = vmin.f32 %v1033, 20.0
  %v1098 = vmin.f32 %v1034, 20.0
  %v1099 = vmin.f32 %v1035, 20.0
  %v1100 = vmin.f32 %v1036, 20.0
  %v1101 = vmin.f32 %v1037, 20.0
  %v1102 = vmin.f32 %v1038, 20.0
  %v1103 = vmin.f32 %v1039, 20.0
  %v1104 = vmin.f32 %v1040, 20.0
  %v1105 = vmin.f32 %v1041, 20.0
  %v1106 = vmin.f32 %v1042, 20.0
  %v1107 = vmin.f32 %v1043, 20.0
  %v1108 = vmin.f32 %v1044, 20.0
  %v1109 = vmin.f32 %v1045, 20.0
  %v1110 = vmin.f32 %v1046, 20.0
  %v1111 = vmin.f32 %v1047, 20.0
  %v1112 = vmin.f32 %v1048, 20.0
  %v1113 = vmin.f32 %v1049, 20.0
  %v1114 = vmin.f32 %v1050, 20.0
  %v1115 = vmul.f32 %v1051, 1.442695
  %v1116 = vpow.pop %v1115
  %v1117 = vmul.f32 %v1052, 1.442695
  %v1118 = vpow.pop %v1117
  %v1119 = vmul.f32 %v1053, 1.442695
  %v1120 = vpow.pop %v1119
  %v1121 = vmul.f32 %v1054, 1.442695
  %v1122 = vpow.pop %v1121
  %v1123 = vmul.f32 %v1055, 1.442695
  %v1124 = vpow.pop %v1123
  %v1125 = vmul.f32 %v1056, 1.442695
  %v1126 = vpow.pop %v1125
  %v1127 = vmul.f32 %v1057, 1.442695
  %v1128 = vpow.pop %v1127
  %v1129 = vmul.f32 %v1058, 1.442695
  %v1130 = vpow.pop %v1129
  %v1131 = vmul.f32 %v1059, 1.442695
  %v1132 = vpow.pop %v1131
  %v1133 = vmul.f32 %v1060, 1.442695
  %v1134 = vpow.pop %v1133
  %v1135 = vmul.f32 %v1061, 1.442695
  %v1136 = vpow.pop %v1135
  %v1137 = vmul.f32 %v1062, 1.442695
  %v1138 = vpow.pop %v1137
  %v1139 = vmul.f32 %v1063, 1.442695
  %v1140 = vpow.pop %v1139
  %v1141 = vmul.f32 %v1064, 1.442695
  %v1142 = vpow.pop %v1141
  %v1143 = vmul.f32 %v1065, 1.442695
  %v1144 = vpow.pop %v1143
  %v1145 = vmul.f32 %v1066, 1.442695
  %v1146 = vpow.pop %v1145
  %v1147 = vmul.f32 %v1067, 1.442695
  %v1148 = vpow.pop %v1147
  %v1149 = vmul.f32 %v1068, 1.442695
  %v1150 = vpow.pop %v1149
  %v1151 = vmul.f32 %v1069, 1.442695
  %v1152 = vpow.pop %v1151
  %v1153 = vmul.f32 %v1070, 1.442695
  %v1154 = vpow.pop %v1153
  %v1155 = vmul.f32 %v1071, 1.442695
  %v1156 = vpow.pop %v1155
  %v1157 = vmul.f32 %v1072, 1.442695
  %v1158 = vpow.pop %v1157
  %v1159 = vmul.f32 %v1073, 1.442695
  %v1160 = vpow.pop %v1159
  %v1161 = vmul.f32 %v1074, 1.442695
  %v1162 = vpow.pop %v1161
  %v1163 = vmul.f32 %v1075, 1.442695
  %v1164 = vpow.pop %v1163
  %v1165 = vmul.f32 %v1076, 1.442695
  %v1166 = vpow.pop %v1165
  %v1167 = vmul.f32 %v1077, 1.442695
  %v1168 = vpow.pop %v1167
  %v1169 = vmul.f32 %v1078, 1.442695
  %v1170 = vpow.pop %v1169
  %v1171 = vmul.f32 %v1079, 1.442695
  %v1172 = vpow.pop %v1171
  %v1173 = vmul.f32 %v1080, 1.442695
  %v1174 = vpow.pop %v1173
  %v1175 = vmul.f32 %v1081, 1.442695
  %v1176 = vpow.pop %v1175
  %v1177 = vmul.f32 %v1082, 1.442695
  %v1178 = vpow.pop %v1177
  %v1179 = vmul.f32 %v1083, 1.442695
  %v1180 = vpow.pop %v1179
  %v1181 = vmul.f32 %v1084, 1.442695
  %v1182 = vpow.pop %v1181
  %v1183 = vmul.f32 %v1085, 1.442695
  %v1184 = vpow.pop %v1183
  %v1185 = vmul.f32 %v1086, 1.442695
  %v1186 = vpow.pop %v1185
  %v1187 = vmul.f32 %v1087, 1.442695
  %v1188 = vpow.pop %v1187
  %v1189 = vmul.f32 %v1088, 1.442695
  %v1190 = vpow.pop %v1189
  %v1191 = vmul.f32 %v1089, 1.442695
  %v1192 = vpow.pop %v1191
  %v1193 = vmul.f32 %v1090, 1.442695
  %v1194 = vpow.pop %v1193
  %v1195 = vmul.f32 %v1091, 1.442695
  %v1196 = vpow.pop %v1195
  %v1197 = vmul.f32 %v1092, 1.442695
  %v1198 = vpow.pop %v1197
  %v1199 = vmul.f32 %v1093, 1.442695
  %v1200 = vpow.pop %v1199
  %v1201 = vmul.f32 %v1094, 1.442695
  %v1202 = vpow.pop %v1201
  %v1203 = vmul.f32 %v1095, 1.442695
  %v1204 = vpow.pop %v1203
  %v1205 = vmul.f32 %v1096, 1.442695
  %v1206 = vpow.pop %v1205
  %v1207 = vmul.f32 %v1097, 1.442695
  %v1208 = vpow.pop %v1207
  %v1209 = vmul.f32 %v1098, 1.442695
  %v1210 = vpow.pop %v1209
  %v1211 = vmul.f32 %v1099, 1.442695
  %v1212 = vpow.pop %v1211
  %v1213 = vmul.f32 %v1100, 1.442695
  %v1214 = vpow.pop %v1213
  %v1215 = vmul.f32 %v1101, 1.442695
  %v1216 = vpow.pop %v1215
  %v1217 = vmul.f32 %v1102, 1.442695
  %v1218 = vpow.pop %v1217
  %v1219 = vmul.f32 %v1103, 1.442695
  %v1220 = vpow.pop %v1219
  %v1221 = vmul.f32 %v1104, 1.442695
  %v1222 = vpow.pop %v1221
  %v1223 = vmul.f32 %v1105, 1.442695
  %v1224 = vpow.pop %v1223
  %v1225 = vmul.f32 %v1106, 1.442695
  %v1226 = vpow.pop %v1225
  %v1227 = vmul.f32 %v1107, 1.442695
  %v1228 = vpow.pop %v1227
  %v1229 = vmul.f32 %v1108, 1.442695
  %v1230 = vpow.pop %v1229
  %v1231 = vmul.f32 %v1109, 1.442695
  %v1232 = vpow.pop %v1231
  %v1233 = vmul.f32 %v1110, 1.442695
  %v1234 = vpow.pop %v1233
  %v1235 = vmul.f32 %v1111, 1.442695
  %v1236 = vpow.pop %v1235
  %v1237 = vmul.f32 %v1112, 1.442695
  %v1238 = vpow.pop %v1237
  %v1239 = vmul.f32 %v1113, 1.442695
  %v1240 = vpow.pop %v1239
  %v1241 = vmul.f32 %v1114, 1.442695
  %v1242 = vpow.pop %v1241
  %v1243 = vmul.f32 %v1116, %v1116
  %v1244 = vmul.f32 %v1118, %v1118
  %v1245 = vmul.f32 %v1120, %v1120
  %v1246 = vmul.f32 %v1122, %v1122
  %v1247 = vmul.f32 %v1124, %v1124
  %v1248 = vmul.f32 %v1126, %v1126
  %v1249 = vmul.f32 %v1128, %v1128
  %v1250 = vmul.f32 %v1130, %v1130
  %v1251 = vmul.f32 %v1132, %v1132
  %v1252 = vmul.f32 %v1134, %v1134
  %v1253 = vmul.f32 %v1136, %v1136
  %v1254 = vmul.f32 %v1138, %v1138
  %v1255 = vmul.f32 %v1140, %v1140
  %v1256 = vmul.f32 %v1142, %v1142
  %v1257 = vmul.f32 %v1144, %v1144
  %v1258 = vmul.f32 %v1146, %v1146
  %v1259 = vmul.f32 %v1148, %v1148
  %v1260 = vmul.f32 %v1150, %v1150
  %v1261 = vmul.f32 %v1152, %v1152
  %v1262 = vmul.f32 %v1154, %v1154
  %v1263 = vmul.f32 %v1156, %v1156
  %v1264 = vmul.f32 %v1158, %v1158
  %v1265 = vmul.f32 %v1160, %v1160
  %v1266 = vmul.f32 %v1162, %v1162
  %v1267 = vmul.f32 %v1164, %v1164
  %v1268 = vmul.f32 %v1166, %v1166
  %v1269 = vmul.f32 %v1168, %v1168
  %v1270 = vmul.f32 %v1170, %v1170
  %v1271 = vmul.f32 %v1172, %v1172
  %v1272 = vmul.f32 %v1174, %v1174
  %v1273 = vmul.f32 %v1176, %v1176
  %v1274 = vmul.f32 %v1178, %v1178
  %v1275 = vmul.f32 %v1180, %v1180
  %v1276 = vmul.f32 %v1182, %v1182
  %v1277 = vmul.f32 %v1184, %v1184
  %v1278 = vmul.f32 %v1186, %v1186
  %v1279 = vmul.f32 %v1188, %v1188
  %v1280 = vmul.f32 %v1190, %v1190
  %v1281 = vmul.f32 %v1192, %v1192
  %v1282 = vmul.f32 %v1194, %v1194
  %v1283 = vmul.f32 %v1196, %v1196
  %v1284 = vmul.f32 %v1198, %v1198
  %v1285 = vmul.f32 %v1200, %v1200
  %v1286 = vmul.f32 %v1202, %v1202
  %v1287 = vmul.f32 %v1204, %v1204
  %v1288 = vmul.f32 %v1206, %v1206
  %v1289 = vmul.f32 %v1208, %v1208
  %v1290 = vmul.f32 %v1210, %v1210
  %v1291 = vmul.f32 %v1212, %v1212
  %v1292 = vmul.f32 %v1214, %v1214
  %v1293 = vmul.f32 %v1216, %v1216
  %v1294 = vmul.f32 %v1218, %v1218
  %v1295 = vmul.f32 %v1220, %v1220
  %v1296 = vmul.f32 %v1222, %v1222
  %v1297 = vmul.f32 %v1224, %v1224
  %v1298 = vmul.f32 %v1226, %v1226
  %v1299 = vmul.f32 %v1228, %v1228
  %v1300 = vmul.f32 %v1230, %v1230
  %v1301 = vmul.f32 %v1232, %v1232
  %v1302 = vmul.f32 %v1234, %v1234
  %v1303 = vmul.f32 %v1236, %v1236
  %v1304 = vmul.f32 %v1238, %v1238
  %v1305 = vmul.f32 %v1240, %v1240
  %v1306 = vmul.f32 %v1242, %v1242
  %v1307 = vmul.f32 %v1116, 2.0
  %v1308 = vmul.f32 %v1118, 2.0
  %v1309 = vmul.f32 %v1120, 2.0
  %v1310 = vmul.f32 %v1122, 2.0
  %v1311 = vmul.f32 %v1124, 2.0
  %v1312 = vmul.f32 %v1126, 2.0
  %v1313 = vmul.f32 %v1128, 2.0
  %v1314 = vmul.f32 %v1130, 2.0
  %v1315 = vmul.f32 %v1132, 2.0
  %v1316 = vmul.f32 %v1134, 2.0
  %v1317 = vmul.f32 %v1136, 2.0
  %v1318 = vmul.f32 %v1138, 2.0
  %v1319 = vmul.f32 %v1140, 2.0
  %v1320 = vmul.f32 %v1142, 2.0
  %v1321 = vmul.f32 %v1144, 2.0
  %v1322 = vmul.f32 %v1146, 2.0
  %v1323 = vmul.f32 %v1148, 2.0
  %v1324 = vmul.f32 %v1150, 2.0
  %v1325 = vmul.f32 %v1152, 2.0
  %v1326 = vmul.f32 %v1154, 2.0
  %v1327 = vmul.f32 %v1156, 2.0
  %v1328 = vmul.f32 %v1158, 2.0
  %v1329 = vmul.f32 %v1160, 2.0
  %v1330 = vmul.f32 %v1162, 2.0
  %v1331 = vmul.f32 %v1164, 2.0
  %v1332 = vmul.f32 %v1166, 2.0
  %v1333 = vmul.f32 %v1168, 2.0
  %v1334 = vmul.f32 %v1170, 2.0
  %v1335 = vmul.f32 %v1172, 2.0
  %v1336 = vmul.f32 %v1174, 2.0
  %v1337 = vmul.f32 %v1176, 2.0
  %v1338 = vmul.f32 %v1178, 2.0
  %v1339 = vmul.f32 %v1180, 2.0
  %v1340 = vmul.f32 %v1182, 2.0
  %v1341 = vmul.f32 %v1184, 2.0
  %v1342 = vmul.f32 %v1186, 2.0
  %v1343 = vmul.f32 %v1188, 2.0
  %v1344 = vmul.f32 %v1190, 2.0
  %v1345 = vmul.f32 %v1192, 2.0
  %v1346 = vmul.f32 %v1194, 2.0
  %v1347 = vmul.f32 %v1196, 2.0
  %v1348 = vmul.f32 %v1198, 2.0
  %v1349 = vmul.f32 %v1200, 2.0
  %v1350 = vmul.f32 %v1202, 2.0
  %v1351 = vmul.f32 %v1204, 2.0
  %v1352 = vmul.f32 %v1206, 2.0
  %v1353 = vmul.f32 %v1208, 2.0
  %v1354 = vmul.f32 %v1210, 2.0
  %v1355 = vmul.f32 %v1212, 2.0
  %v1356 = vmul.f32 %v1214, 2.0
  %v1357 = vmul.f32 %v1216, 2.0
  %v1358 = vmul.f32 %v1218, 2.0
  %v1359 = vmul.f32 %v1220, 2.0
  %v1360 = vmul.f32 %v1222, 2.0
  %v1361 = vmul.f32 %v1224, 2.0
  %v1362 = vmul.f32 %v1226, 2.0
  %v1363 = vmul.f32 %v1228, 2.0
  %v1364 = vmul.f32 %v1230, 2.0
  %v1365 = vmul.f32 %v1232, 2.0
  %v1366 = vmul.f32 %v1234, 2.0
  %v1367 = vmul.f32 %v1236, 2.0
  %v1368 = vmul.f32 %v1238, 2.0
  %v1369 = vmul.f32 %v1240, 2.0
  %v1370 = vmul.f32 %v1242, 2.0
  %v1371 = vadd.f32 %v1243, %v1307
  %v1372 = vadd.f32 %v1244, %v1308
  %v1373 = vadd.f32 %v1245, %v1309
  %v1374 = vadd.f32 %v1246, %v1310
  %v1375 = vadd.f32 %v1247, %v1311
  %v1376 = vadd.f32 %v1248, %v1312
  %v1377 = vadd.f32 %v1249, %v1313
  %v1378 = vadd.f32 %v1250, %v1314
  %v1379 = vadd.f32 %v1251, %v1315
  %v1380 = vadd.f32 %v1252, %v1316
  %v1381 = vadd.f32 %v1253, %v1317
  %v1382 = vadd.f32 %v1254, %v1318
  %v1383 = vadd.f32 %v1255, %v1319
  %v1384 = vadd.f32 %v1256, %v1320
  %v1385 = vadd.f32 %v1257, %v1321
  %v1386 = vadd.f32 %v1258, %v1322
  %v1387 = vadd.f32 %v1259, %v1323
  %v1388 = vadd.f32 %v1260, %v1324
  %v1389 = vadd.f32 %v1261, %v1325
  %v1390 = vadd.f32 %v1262, %v1326
  %v1391 = vadd.f32 %v1263, %v1327
  %v1392 = vadd.f32 %v1264, %v1328
  %v1393 = vadd.f32 %v1265, %v1329
  %v1394 = vadd.f32 %v1266, %v1330
  %v1395 = vadd.f32 %v1267, %v1331
  %v1396 = vadd.f32 %v1268, %v1332
  %v1397 = vadd.f32 %v1269, %v1333
  %v1398 = vadd.f32 %v1270, %v1334
  %v1399 = vadd.f32 %v1271, %v1335
  %v1400 = vadd.f32 %v1272, %v1336
  %v1401 = vadd.f32 %v1273, %v1337
  %v1402 = vadd.f32 %v1274, %v1338
  %v1403 = vadd.f32 %v1275, %v1339
  %v1404 = vadd.f32 %v1276, %v1340
  %v1405 = vadd.f32 %v1277, %v1341
  %v1406 = vadd.f32 %v1278, %v1342
  %v1407 = vadd.f32 %v1279, %v1343
  %v1408 = vadd.f32 %v1280, %v1344
  %v1409 = vadd.f32 %v1281, %v1345
  %v1410 = vadd.f32 %v1282, %v1346
  %v1411 = vadd.f32 %v1283, %v1347
  %v1412 = vadd.f32 %v1284, %v1348
  %v1413 = vadd.f32 %v1285, %v1349
  %v1414 = vadd.f32 %v1286, %v1350
  %v1415 = vadd.f32 %v1287, %v1351
  %v1416 = vadd.f32 %v1288, %v1352
  %v1417 = vadd.f32 %v1289, %v1353
  %v1418 = vadd.f32 %v1290, %v1354
  %v1419 = vadd.f32 %v1291, %v1355
  %v1420 = vadd.f32 %v1292, %v1356
  %v1421 = vadd.f32 %v1293, %v1357
  %v1422 = vadd.f32 %v1294, %v1358
  %v1423 = vadd.f32 %v1295, %v1359
  %v1424 = vadd.f32 %v1296, %v1360
  %v1425 = vadd.f32 %v1297, %v1361
  %v1426 = vadd.f32 %v1298, %v1362
  %v1427 = vadd.f32 %v1299, %v1363
  %v1428 = vadd.f32 %v1300, %v1364
  %v1429 = vadd.f32 %v1301, %v1365
  %v1430 = vadd.f32 %v1302, %v1366
  %v1431 = vadd.f32 %v1303, %v1367
  %v1432 = vadd.f32 %v1304, %v1368
  %v1433 = vadd.f32 %v1305, %v1369
  %v1434 = vadd.f32 %v1306, %v1370
  %v1435 = vadd.f32 %v1371, 2.0
  %v1436 = vadd.f32 %v1372, 2.0
  %v1437 = vadd.f32 %v1373, 2.0
  %v1438 = vadd.f32 %v1374, 2.0
  %v1439 = vadd.f32 %v1375, 2.0
  %v1440 = vadd.f32 %v1376, 2.0
  %v1441 = vadd.f32 %v1377, 2.0
  %v1442 = vadd.f32 %v1378, 2.0
  %v1443 = vadd.f32 %v1379, 2.0
  %v1444 = vadd.f32 %v1380, 2.0
  %v1445 = vadd.f32 %v1381, 2.0
  %v1446 = vadd.f32 %v1382, 2.0
  %v1447 = vadd.f32 %v1383, 2.0
  %v1448 = vadd.f32 %v1384, 2.0
  %v1449 = vadd.f32 %v1385, 2.0
  %v1450 = vadd.f32 %v1386, 2.0
  %v1451 = vadd.f32 %v1387, 2.0
  %v1452 = vadd.f32 %v1388, 2.0
  %v1453 = vadd.f32 %v1389, 2.0
  %v1454 = vadd.f32 %v1390, 2.0
  %v1455 = vadd.f32 %v1391, 2.0
  %v1456 = vadd.f32 %v1392, 2.0
  %v1457 = vadd.f32 %v1393, 2.0
  %v1458 = vadd.f32 %v1394, 2.0
  %v1459 = vadd.f32 %v1395, 2.0
  %v1460 = vadd.f32 %v1396, 2.0
  %v1461 = vadd.f32 %v1397, 2.0
  %v1462 = vadd.f32 %v1398, 2.0
  %v1463 = vadd.f32 %v1399, 2.0
  %v1464 = vadd.f32 %v1400, 2.0
  %v1465 = vadd.f32 %v1401, 2.0
  %v1466 = vadd.f32 %v1402, 2.0
  %v1467 = vadd.f32 %v1403, 2.0
  %v1468 = vadd.f32 %v1404, 2.0
  %v1469 = vadd.f32 %v1405, 2.0
  %v1470 = vadd.f32 %v1406, 2.0
  %v1471 = vadd.f32 %v1407, 2.0
  %v1472 = vadd.f32 %v1408, 2.0
  %v1473 = vadd.f32 %v1409, 2.0
  %v1474 = vadd.f32 %v1410, 2.0
  %v1475 = vadd.f32 %v1411, 2.0
  %v1476 = vadd.f32 %v1412, 2.0
  %v1477 = vadd.f32 %v1413, 2.0
  %v1478 = vadd.f32 %v1414, 2.0
  %v1479 = vadd.f32 %v1415, 2.0
  %v1480 = vadd.f32 %v1416, 2.0
  %v1481 = vadd.f32 %v1417, 2.0
  %v1482 = vadd.f32 %v1418, 2.0
  %v1483 = vadd.f32 %v1419, 2.0
  %v1484 = vadd.f32 %v1420, 2.0
  %v1485 = vadd.f32 %v1421, 2.0
  %v1486 = vadd.f32 %v1422, 2.0
  %v1487 = vadd.f32 %v1423, 2.0
  %v1488 = vadd.f32 %v1424, 2.0
  %v1489 = vadd.f32 %v1425, 2.0
  %v1490 = vadd.f32 %v1426, 2.0
  %v1491 = vadd.f32 %v1427, 2.0
  %v1492 = vadd.f32 %v1428, 2.0
  %v1493 = vadd.f32 %v1429, 2.0
  %v1494 = vadd.f32 %v1430, 2.0
  %v1495 = vadd.f32 %v1431, 2.0
  %v1496 = vadd.f32 %v1432, 2.0
  %v1497 = vadd.f32 %v1433, 2.0
  %v1498 = vadd.f32 %v1434, 2.0
  %v1499 = vrcp.pop %v1435
  %v1500 = vrcp.pop %v1436
  %v1501 = vrcp.pop %v1437
  %v1502 = vrcp.pop %v1438
  %v1503 = vrcp.pop %v1439
  %v1504 = vrcp.pop %v1440
  %v1505 = vrcp.pop %v1441
  %v1506 = vrcp.pop %v1442
  %v1507 = vrcp.pop %v1443
  %v1508 = vrcp.pop %v1444
  %v1509 = vrcp.pop %v1445
  %v1510 = vrcp.pop %v1446
  %v1511 = vrcp.pop %v1447
  %v1512 = vrcp.pop %v1448
  %v1513 = vrcp.pop %v1449
  %v1514 = vrcp.pop %v1450
  %v1515 = vrcp.pop %v1451
  %v1516 = vrcp.pop %v1452
  %v1517 = vrcp.pop %v1453
  %v1518 = vrcp.pop %v1454
  %v1519 = vrcp.pop %v1455
  %v1520 = vrcp.pop %v1456
  %v1521 = vrcp.pop %v1457
  %v1522 = vrcp.pop %v1458
  %v1523 = vrcp.pop %v1459
  %v1524 = vrcp.pop %v1460
  %v1525 = vrcp.pop %v1461
  %v1526 = vrcp.pop %v1462
  %v1527 = vrcp.pop %v1463
  %v1528 = vrcp.pop %v1464
  %v1529 = vrcp.pop %v1465
  %v1530 = vrcp.pop %v1466
  %v1531 = vrcp.pop %v1467
  %v1532 = vrcp.pop %v1468
  %v1533 = vrcp.pop %v1469
  %v1534 = vrcp.pop %v1470
  %v1535 = vrcp.pop %v1471
  %v1536 = vrcp.pop %v1472
  %v1537 = vrcp.pop %v1473
  %v1538 = vrcp.pop %v1474
  %v1539 = vrcp.pop %v1475
  %v1540 = vrcp.pop %v1476
  %v1541 = vrcp.pop %v1477
  %v1542 = vrcp.pop %v1478
  %v1543 = vrcp.pop %v1479
  %v1544 = vrcp.pop %v1480
  %v1545 = vrcp.pop %v1481
  %v1546 = vrcp.pop %v1482
  %v1547 = vrcp.pop %v1483
  %v1548 = vrcp.pop %v1484
  %v1549 = vrcp.pop %v1485
  %v1550 = vrcp.pop %v1486
  %v1551 = vrcp.pop %v1487
  %v1552 = vrcp.pop %v1488
  %v1553 = vrcp.pop %v1489
  %v1554 = vrcp.pop %v1490
  %v1555 = vrcp.pop %v1491
  %v1556 = vrcp.pop %v1492
  %v1557 = vrcp.pop %v1493
  %v1558 = vrcp.pop %v1494
  %v1559 = vrcp.pop %v1495
  %v1560 = vrcp.pop %v1496
  %v1561 = vrcp.pop %v1497
  %v1562 = vrcp.pop %v1498
  %v1563 = vmul.f32 %v1371, %v1499
  %v1564 = vmul.f32 %v1372, %v1500
  %v1565 = vmul.f32 %v1373, %v1501
  %v1566 = vmul.f32 %v1374, %v1502
  %v1567 = vmul.f32 %v1375, %v1503
  %v1568 = vmul.f32 %v1376, %v1504
  %v1569 = vmul.f32 %v1377, %v1505
  %v1570 = vmul.f32 %v1378, %v1506
  %v1571 = vmul.f32 %v1379, %v1507
  %v1572 = vmul.f32 %v1380, %v1508
  %v1573 = vmul.f32 %v1381, %v1509
  %v1574 = vmul.f32 %v1382, %v1510
  %v1575 = vmul.f32 %v1383, %v1511
  %v1576 = vmul.f32 %v1384, %v1512
  %v1577 = vmul.f32 %v1385, %v1513
  %v1578 = vmul.f32 %v1386, %v1514
  %v1579 = vmul.f32 %v1387, %v1515
  %v1580 = vmul.f32 %v1388, %v1516
  %v1581 = vmul.f32 %v1389, %v1517
  %v1582 = vmul.f32 %v1390, %v1518
  %v1583 = vmul.f32 %v1391, %v1519
  %v1584 = vmul.f32 %v1392, %v1520
  %v1585 = vmul.f32 %v1393, %v1521
  %v1586 = vmul.f32 %v1394, %v1522
  %v1587 = vmul.f32 %v1395, %v1523
  %v1588 = vmul.f32 %v1396, %v1524
  %v1589 = vmul.f32 %v1397, %v1525
  %v1590 = vmul.f32 %v1398, %v1526
  %v1591 = vmul.f32 %v1399, %v1527
  %v1592 = vmul.f32 %v1400, %v1528
  %v1593 = vmul.f32 %v1401, %v1529
  %v1594 = vmul.f32 %v1402, %v1530
  %v1595 = vmul.f32 %v1403, %v1531
  %v1596 = vmul.f32 %v1404, %v1532
  %v1597 = vmul.f32 %v1405, %v1533
  %v1598 = vmul.f32 %v1406, %v1534
  %v1599 = vmul.f32 %v1407, %v1535
  %v1600 = vmul.f32 %v1408, %v1536
  %v1601 = vmul.f32 %v1409, %v1537
  %v1602 = vmul.f32 %v1410, %v1538
  %v1603 = vmul.f32 %v1411, %v1539
  %v1604 = vmul.f32 %v1412, %v1540
  %v1605 = vmul.f32 %v1413, %v1541
  %v1606 = vmul.f32 %v1414, %v1542
  %v1607 = vmul.f32 %v1415, %v1543
  %v1608 = vmul.f32 %v1416, %v1544
  %v1609 = vmul.f32 %v1417, %v1545
  %v1610 = vmul.f32 %v1418, %v1546
  %v1611 = vmul.f32 %v1419, %v1547
  %v1612 = vmul.f32 %v1420, %v1548
  %v1613 = vmul.f32 %v1421, %v1549
  %v1614 = vmul.f32 %v1422, %v1550
  %v1615 = vmul.f32 %v1423, %v1551
  %v1616 = vmul.f32 %v1424, %v1552
  %v1617 = vmul.f32 %v1425, %v1553
  %v1618 = vmul.f32 %v1426, %v1554
  %v1619 = vmul.f32 %v1427, %v1555
  %v1620 = vmul.f32 %v1428, %v1556
  %v1621 = vmul.f32 %v1429, %v1557
  %v1622 = vmul.f32 %v1430, %v1558
  %v1623 = vmul.f32 %v1431, %v1559
  %v1624 = vmul.f32 %v1432, %v1560
  %v1625 = vmul.f32 %v1433, %v1561
  %v1626 = vmul.f32 %v1434, %v1562
  %vm1627 = vcmp.gt.f32.partialorder %v987, 20.0
  %vm1628 = vcmp.gt.f32.partialorder %v988, 20.0
  %vm1629 = vcmp.gt.f32.partialorder %v989, 20.0
  %vm1630 = vcmp.gt.f32.partialorder %v990, 20.0
  %vm1631 = vcmp.gt.f32.partialorder %v991, 20.0
  %vm1632 = vcmp.gt.f32.partialorder %v992, 20.0
  %vm1633 = vcmp.gt.f32.partialorder %v993, 20.0
  %vm1634 = vcmp.gt.f32.partialorder %v994, 20.0
  %vm1635 = vcmp.gt.f32.partialorder %v995, 20.0
  %vm1636 = vcmp.gt.f32.partialorder %v996, 20.0
  %vm1637 = vcmp.gt.f32.partialorder %v997, 20.0
  %vm1638 = vcmp.gt.f32.partialorder %v998, 20.0
  %vm1639 = vcmp.gt.f32.partialorder %v999, 20.0
  %vm1640 = vcmp.gt.f32.partialorder %v1000, 20.0
  %vm1641 = vcmp.gt.f32.partialorder %v1001, 20.0
  %vm1642 = vcmp.gt.f32.partialorder %v1002, 20.0
  %vm1643 = vcmp.gt.f32.partialorder %v1003, 20.0
  %vm1644 = vcmp.gt.f32.partialorder %v1004, 20.0
  %vm1645 = vcmp.gt.f32.partialorder %v1005, 20.0
  %vm1646 = vcmp.gt.f32.partialorder %v1006, 20.0
  %vm1647 = vcmp.gt.f32.partialorder %v1007, 20.0
  %vm1648 = vcmp.gt.f32.partialorder %v1008, 20.0
  %vm1649 = vcmp.gt.f32.partialorder %v1009, 20.0
  %vm1650 = vcmp.gt.f32.partialorder %v1010, 20.0
  %vm1651 = vcmp.gt.f32.partialorder %v1011, 20.0
  %vm1652 = vcmp.gt.f32.partialorder %v1012, 20.0
  %vm1653 = vcmp.gt.f32.partialorder %v1013, 20.0
  %vm1654 = vcmp.gt.f32.partialorder %v1014, 20.0
  %vm1655 = vcmp.gt.f32.partialorder %v1015, 20.0
  %vm1656 = vcmp.gt.f32.partialorder %v1016, 20.0
  %vm1657 = vcmp.gt.f32.partialorder %v1017, 20.0
  %vm1658 = vcmp.gt.f32.partialorder %v1018, 20.0
  %vm1659 = vcmp.gt.f32.partialorder %v1019, 20.0
  %vm1660 = vcmp.gt.f32.partialorder %v1020, 20.0
  %vm1661 = vcmp.gt.f32.partialorder %v1021, 20.0
  %vm1662 = vcmp.gt.f32.partialorder %v1022, 20.0
  %vm1663 = vcmp.gt.f32.partialorder %v1023, 20.0
  %vm1664 = vcmp.gt.f32.partialorder %v1024, 20.0
  %vm1665 = vcmp.gt.f32.partialorder %v1025, 20.0
  %vm1666 = vcmp.gt.f32.partialorder %v1026, 20.0
  %vm1667 = vcmp.gt.f32.partialorder %v1027, 20.0
  %vm1668 = vcmp.gt.f32.partialorder %v1028, 20.0
  %vm1669 = vcmp.gt.f32.partialorder %v1029, 20.0
  %vm1670 = vcmp.gt.f32.partialorder %v1030, 20.0
  %vm1671 = vcmp.gt.f32.partialorder %v1031, 20.0
  %vm1672 = vcmp.gt.f32.partialorder %v1032, 20.0
  %vm1673 = vcmp.gt.f32.partialorder %v1033, 20.0
  %vm1674 = vcmp.gt.f32.partialorder %v1034, 20.0
  %vm1675 = vcmp.gt.f32.partialorder %v1035, 20.0
  %vm1676 = vcmp.gt.f32.partialorder %v1036, 20.0
  %vm1677 = vcmp.gt.f32.partialorder %v1037, 20.0
  %vm1678 = vcmp.gt.f32.partialorder %v1038, 20.0
  %vm1679 = vcmp.gt.f32.partialorder %v1039, 20.0
  %vm1680 = vcmp.gt.f32.partialorder %v1040, 20.0
  %vm1681 = vcmp.gt.f32.partialorder %v1041, 20.0
  %vm1682 = vcmp.gt.f32.partialorder %v1042, 20.0
  %vm1683 = vcmp.gt.f32.partialorder %v1043, 20.0
  %vm1684 = vcmp.gt.f32.partialorder %v1044, 20.0
  %vm1685 = vcmp.gt.f32.partialorder %v1045, 20.0
  %vm1686 = vcmp.gt.f32.partialorder %v1046, 20.0
  %vm1687 = vcmp.gt.f32.partialorder %v1047, 20.0
  %vm1688 = vcmp.gt.f32.partialorder %v1048, 20.0
  %vm1689 = vcmp.gt.f32.partialorder %v1049, 20.0
  %vm1690 = vcmp.gt.f32.partialorder %v1050, 20.0
  %v1691 = vmul.f32 %v987, %v1563
  %v1692 = vmul.f32 %v988, %v1564
  %v1693 = vmul.f32 %v989, %v1565
  %v1694 = vmul.f32 %v990, %v1566
  %v1695 = vmul.f32 %v991, %v1567
  %v1696 = vmul.f32 %v992, %v1568
  %v1697 = vmul.f32 %v993, %v1569
  %v1698 = vmul.f32 %v994, %v1570
  %v1699 = vmul.f32 %v995, %v1571
  %v1700 = vmul.f32 %v996, %v1572
  %v1701 = vmul.f32 %v997, %v1573
  %v1702 = vmul.f32 %v998, %v1574
  %v1703 = vmul.f32 %v999, %v1575
  %v1704 = vmul.f32 %v1000, %v1576
  %v1705 = vmul.f32 %v1001, %v1577
  %v1706 = vmul.f32 %v1002, %v1578
  %v1707 = vmul.f32 %v1003, %v1579
  %v1708 = vmul.f32 %v1004, %v1580
  %v1709 = vmul.f32 %v1005, %v1581
  %v1710 = vmul.f32 %v1006, %v1582
  %v1711 = vmul.f32 %v1007, %v1583
  %v1712 = vmul.f32 %v1008, %v1584
  %v1713 = vmul.f32 %v1009, %v1585
  %v1714 = vmul.f32 %v1010, %v1586
  %v1715 = vmul.f32 %v1011, %v1587
  %v1716 = vmul.f32 %v1012, %v1588
  %v1717 = vmul.f32 %v1013, %v1589
  %v1718 = vmul.f32 %v1014, %v1590
  %v1719 = vmul.f32 %v1015, %v1591
  %v1720 = vmul.f32 %v1016, %v1592
  %v1721 = vmul.f32 %v1017, %v1593
  %v1722 = vmul.f32 %v1018, %v1594
  %v1723 = vmul.f32 %v1019, %v1595
  %v1724 = vmul.f32 %v1020, %v1596
  %v1725 = vmul.f32 %v1021, %v1597
  %v1726 = vmul.f32 %v1022, %v1598
  %v1727 = vmul.f32 %v1023, %v1599
  %v1728 = vmul.f32 %v1024, %v1600
  %v1729 = vmul.f32 %v1025, %v1601
  %v1730 = vmul.f32 %v1026, %v1602
  %v1731 = vmul.f32 %v1027, %v1603
  %v1732 = vmul.f32 %v1028, %v1604
  %v1733 = vmul.f32 %v1029, %v1605
  %v1734 = vmul.f32 %v1030, %v1606
  %v1735 = vmul.f32 %v1031, %v1607
  %v1736 = vmul.f32 %v1032, %v1608
  %v1737 = vmul.f32 %v1033, %v1609
  %v1738 = vmul.f32 %v1034, %v1610
  %v1739 = vmul.f32 %v1035, %v1611
  %v1740 = vmul.f32 %v1036, %v1612
  %v1741 = vmul.f32 %v1037, %v1613
  %v1742 = vmul.f32 %v1038, %v1614
  %v1743 = vmul.f32 %v1039, %v1615
  %v1744 = vmul.f32 %v1040, %v1616
  %v1745 = vmul.f32 %v1041, %v1617
  %v1746 = vmul.f32 %v1042, %v1618
  %v1747 = vmul.f32 %v1043, %v1619
  %v1748 = vmul.f32 %v1044, %v1620
  %v1749 = vmul.f32 %v1045, %v1621
  %v1750 = vmul.f32 %v1046, %v1622
  %v1751 = vmul.f32 %v1047, %v1623
  %v1752 = vmul.f32 %v1048, %v1624
  %v1753 = vmul.f32 %v1049, %v1625
  %v1754 = vmul.f32 %v1050, %v1626
  %v1755 = vsel %vm1627, %v987, %v1691
  %v1756 = vsel %vm1628, %v988, %v1692
  %v1757 = vsel %vm1629, %v989, %v1693
  %v1758 = vsel %vm1630, %v990, %v1694
  %v1759 = vsel %vm1631, %v991, %v1695
  %v1760 = vsel %vm1632, %v992, %v1696
  %v1761 = vsel %vm1633, %v993, %v1697
  %v1762 = vsel %vm1634, %v994, %v1698
  %v1763 = vsel %vm1635, %v995, %v1699
  %v1764 = vsel %vm1636, %v996, %v1700
  %v1765 = vsel %vm1637, %v997, %v1701
  %v1766 = vsel %vm1638, %v998, %v1702
  %v1767 = vsel %vm1639, %v999, %v1703
  %v1768 = vsel %vm1640, %v1000, %v1704
  %v1769 = vsel %vm1641, %v1001, %v1705
  %v1770 = vsel %vm1642, %v1002, %v1706
  %v1771 = vsel %vm1643, %v1003, %v1707
  %v1772 = vsel %vm1644, %v1004, %v1708
  %v1773 = vsel %vm1645, %v1005, %v1709
  %v1774 = vsel %vm1646, %v1006, %v1710
  %v1775 = vsel %vm1647, %v1007, %v1711
  %v1776 = vsel %vm1648, %v1008, %v1712
  %v1777 = vsel %vm1649, %v1009, %v1713
  %v1778 = vsel %vm1650, %v1010, %v1714
  %v1779 = vsel %vm1651, %v1011, %v1715
  %v1780 = vsel %vm1652, %v1012, %v1716
  %v1781 = vsel %vm1653, %v1013, %v1717
  %v1782 = vsel %vm1654, %v1014, %v1718
  %v1783 = vsel %vm1655, %v1015, %v1719
  %v1784 = vsel %vm1656, %v1016, %v1720
  %v1785 = vsel %vm1657, %v1017, %v1721
  %v1786 = vsel %vm1658, %v1018, %v1722
  %v1787 = vsel %vm1659, %v1019, %v1723
  %v1788 = vsel %vm1660, %v1020, %v1724
  %v1789 = vsel %vm1661, %v1021, %v1725
  %v1790 = vsel %vm1662, %v1022, %v1726
  %v1791 = vsel %vm1663, %v1023, %v1727
  %v1792 = vsel %vm1664, %v1024, %v1728
  %v1793 = vsel %vm1665, %v1025, %v1729
  %v1794 = vsel %vm1666, %v1026, %v1730
  %v1795 = vsel %vm1667, %v1027, %v1731
  %v1796 = vsel %vm1668, %v1028, %v1732
  %v1797 = vsel %vm1669, %v1029, %v1733
  %v1798 = vsel %vm1670, %v1030, %v1734
  %v1799 = vsel %vm1671, %v1031, %v1735
  %v1800 = vsel %vm1672, %v1032, %v1736
  %v1801 = vsel %vm1673, %v1033, %v1737
  %v1802 = vsel %vm1674, %v1034, %v1738
  %v1803 = vsel %vm1675, %v1035, %v1739
  %v1804 = vsel %vm1676, %v1036, %v1740
  %v1805 = vsel %vm1677, %v1037, %v1741
  %v1806 = vsel %vm1678, %v1038, %v1742
  %v1807 = vsel %vm1679, %v1039, %v1743
  %v1808 = vsel %vm1680, %v1040, %v1744
  %v1809 = vsel %vm1681, %v1041, %v1745
  %v1810 = vsel %vm1682, %v1042, %v1746
  %v1811 = vsel %vm1683, %v1043, %v1747
  %v1812 = vsel %vm1684, %v1044, %v1748
  %v1813 = vsel %vm1685, %v1045, %v1749
  %v1814 = vsel %vm1686, %v1046, %v1750
  %v1815 = vsel %vm1687, %v1047, %v1751
  %v1816 = vsel %vm1688, %v1048, %v1752
  %v1817 = vsel %vm1689, %v1049, %v1753
  %v1818 = vsel %vm1690, %v1050, %v1754
  %1819 = vst.msk [vmem:[%s4] sm:$0xff] %vm506, %v1755
  %1820 = vst.msk [vmem:[%s4 + $0x8] sm:$0xff] %vm506, %v1756
  %1821 = vst.msk [vmem:[%s4 + $0x10] sm:$0xff] %vm506, %v1757
  %1822 = vst.msk [vmem:[%s4 + $0x18] sm:$0xff] %vm506, %v1758
  %1823 = vst.msk [vmem:[%s4 + $0x20] sm:$0xff] %vm506, %v1759
  %1824 = vst.msk [vmem:[%s4 + $0x28] sm:$0xff] %vm506, %v1760
  %1825 = vst.msk [vmem:[%s4 + $0x30] sm:$0xff] %vm506, %v1761
  %1826 = vst.msk [vmem:[%s4 + $0x38] sm:$0xff] %vm506, %v1762
  %1827 = vst.msk [vmem:[%s4 + $0x40] sm:$0xff] %vm506, %v1763
  %1828 = vst.msk [vmem:[%s4 + $0x48] sm:$0xff] %vm506, %v1764
  %1829 = vst.msk [vmem:[%s4 + $0x50] sm:$0xff] %vm506, %v1765
  %1830 = vst.msk [vmem:[%s4 + $0x58] sm:$0xff] %vm506, %v1766
  %1831 = vst.msk [vmem:[%s4 + $0x60] sm:$0xff] %vm506, %v1767
  %1832 = vst.msk [vmem:[%s4 + $0x68] sm:$0xff] %vm506, %v1768
  %1833 = vst.msk [vmem:[%s4 + $0x70] sm:$0xff] %vm506, %v1769
  %1834 = vst.msk [vmem:[%s4 + $0x78] sm:$0xff] %vm506, %v1770
  %1835 = vst.msk [vmem:[%s4 + $0x80] sm:$0xff] %vm506, %v1771
  %1836 = vst.msk [vmem:[%s4 + $0x88] sm:$0xff] %vm506, %v1772
  %1837 = vst.msk [vmem:[%s4 + $0x90] sm:$0xff] %vm506, %v1773
  %1838 = vst.msk [vmem:[%s4 + $0x98] sm:$0xff] %vm506, %v1774
  %1839 = vst.msk [vmem:[%s4 + $0xa0] sm:$0xff] %vm506, %v1775
  %1840 = vst.msk [vmem:[%s4 + $0xa8] sm:$0xff] %vm506, %v1776
  %1841 = vst.msk [vmem:[%s4 + $0xb0] sm:$0xff] %vm506, %v1777
  %1842 = vst.msk [vmem:[%s4 + $0xb8] sm:$0xff] %vm506, %v1778
  %1843 = vst.msk [vmem:[%s4 + $0xc0] sm:$0xff] %vm506, %v1779
  %1844 = vst.msk [vmem:[%s4 + $0xc8] sm:$0xff] %vm506, %v1780
  %1845 = vst.msk [vmem:[%s4 + $0xd0] sm:$0xff] %vm506, %v1781
  %1846 = vst.msk [vmem:[%s4 + $0xd8] sm:$0xff] %vm506, %v1782
  %1847 = vst.msk [vmem:[%s4 + $0xe0] sm:$0xff] %vm506, %v1783
  %1848 = vst.msk [vmem:[%s4 + $0xe8] sm:$0xff] %vm506, %v1784
  %1849 = vst.msk [vmem:[%s4 + $0xf0] sm:$0xff] %vm506, %v1785
  %1850 = vst.msk [vmem:[%s4 + $0xf8] sm:$0xff] %vm506, %v1786
  %1851 = vst.msk [vmem:[%s4 + $0x100] sm:$0xff] %vm506, %v1787
  %1852 = vst.msk [vmem:[%s4 + $0x108] sm:$0xff] %vm506, %v1788
  %1853 = vst.msk [vmem:[%s4 + $0x110] sm:$0xff] %vm506, %v1789
  %1854 = vst.msk [vmem:[%s4 + $0x118] sm:$0xff] %vm506, %v1790
  %1855 = vst.msk [vmem:[%s4 + $0x120] sm:$0xff] %vm506, %v1791
  %1856 = vst.msk [vmem:[%s4 + $0x128] sm:$0xff] %vm506, %v1792
  %1857 = vst.msk [vmem:[%s4 + $0x130] sm:$0xff] %vm506, %v1793
  %1858 = vst.msk [vmem:[%s4 + $0x138] sm:$0xff] %vm506, %v1794
  %1859 = vst.msk [vmem:[%s4 + $0x140] sm:$0xff] %vm506, %v1795
  %1860 = vst.msk [vmem:[%s4 + $0x148] sm:$0xff] %vm506, %v1796
  %1861 = vst.msk [vmem:[%s4 + $0x150] sm:$0xff] %vm506, %v1797
  %1862 = vst.msk [vmem:[%s4 + $0x158] sm:$0xff] %vm506, %v1798
  %1863 = vst.msk [vmem:[%s4 + $0x160] sm:$0xff] %vm506, %v1799
  %1864 = vst.msk [vmem:[%s4 + $0x168] sm:$0xff] %vm506, %v1800
  %1865 = vst.msk [vmem:[%s4 + $0x170] sm:$0xff] %vm506, %v1801
  %1866 = vst.msk [vmem:[%s4 + $0x178] sm:$0xff] %vm506, %v1802
  %1867 = vst.msk [vmem:[%s4 + $0x180] sm:$0xff] %vm506, %v1803
  %1868 = vst.msk [vmem:[%s4 + $0x188] sm:$0xff] %vm506, %v1804
  %1869 = vst.msk [vmem:[%s4 + $0x190] sm:$0xff] %vm506, %v1805
  %1870 = vst.msk [vmem:[%s4 + $0x198] sm:$0xff] %vm506, %v1806
  %1871 = vst.msk [vmem:[%s4 + $0x1a0] sm:$0xff] %vm506, %v1807
  %1872 = vst.msk [vmem:[%s4 + $0x1a8] sm:$0xff] %vm506, %v1808
  %1873 = vst.msk [vmem:[%s4 + $0x1b0] sm:$0xff] %vm506, %v1809
  %1874 = vst.msk [vmem:[%s4 + $0x1b8] sm:$0xff] %vm506, %v1810
  %1875 = vst.msk [vmem:[%s4 + $0x1c0] sm:$0xff] %vm506, %v1811
  %1876 = vst.msk [vmem:[%s4 + $0x1c8] sm:$0xff] %vm506, %v1812
  %1877 = vst.msk [vmem:[%s4 + $0x1d0] sm:$0xff] %vm506, %v1813
  %1878 = vst.msk [vmem:[%s4 + $0x1d8] sm:$0xff] %vm506, %v1814
  %1879 = vst.msk [vmem:[%s4 + $0x1e0] sm:$0xff] %vm506, %v1815
  %1880 = vst.msk [vmem:[%s4 + $0x1e8] sm:$0xff] %vm506, %v1816
  %1881 = vst.msk [vmem:[%s4 + $0x1f0] sm:$0xff] %vm506, %v1817
  %1882 = vst.msk [vmem:[%s4 + $0x1f8] sm:$0xff] %vm506, %v1818
  // Predicated region
  $region18: #{fd_forward.1} parent=0 // pred_check
    _
  $region19: #{fd_forward.1} parent=0 // pred_check_branch
    %1884 = sbr.rel (0) target = $region21
  $region20: #{fd_forward.1} parent=0 // pred_region
    _
  $region21: #{fd_forward.1} parent=0 // pred_fallthru
    _
  // Predicated region
  $region22: #{fd_forward.1} parent=0 // pred_check
    _
  $region23: #{fd_forward.1} parent=0 // pred_check_branch
    %1886 = sbr.rel (0) target = $region25
  $region24: #{fd_forward.1} parent=0 // pred_region
    _
  $region25: #{fd_forward.1} parent=0 // pred_fallthru
    _

</llo_original>
